<compile_context>
chip_gen: v5e
topology: v5e:2x2
jax: 0.10.0
libtpu: 0.0.40
codegen_flags: <defaults>
</compile_context>

<pallas_src>
import jax
import jax.numpy as jnp
import numpy as np
from jax import lax
from jax.experimental import pallas as pl
from jax.experimental.pallas import tpu as pltpu  # noqa: F401  (TPU backend)

INPUT_SIZE = 4
SEQ_LEN = 8
HIDDEN_SIZE = 32
OUTPUT_SIZE = 8
GENOTYPE = [("LSTM", {"num_layers": 1}),
            ("CNN", {"kernel_size": 3}),
            ("Identity", {})]
# TODO(synk): GRU / TransformerEncoderLayer genotype branches are not exercised by
# this genotype and are therefore not implemented here.


def _full_spec(shape):
    nd = len(shape)
    return pl.BlockSpec(shape, lambda *_: (0,) * nd)


# ---------------- fused Pallas kernel ----------------

def _infer_cell_fused_kernel(x_ref, gxw_ref, gxb_ref, whh4_ref, cw01_ref, cb_ref,
                             w1_ref, b1_ref, w2_ref, b2_ref, o_ref):
    # x:     (B, I)
    # gxw:   (I, T*4H)  = expand_w blocks @ W_ih   (expand Linear folded in)
    # gxb:   (1, T*4H)  = expand_b blocks @ W_ih + (b_ih + b_hh)
    # whh4:  (4, H, H)  = recurrent weight split per gate [i, f, g, o]
    # cw01:  (2, H, H)  = conv taps 0 and 1 (tap 2 hits the right zero pad at t=T-1)
    # cb:    (1, H), w1: (H, 4H), b1: (1, 4H), w2: (4H, O), b2: (1, O)
    B = x_ref.shape[0]
    H = whh4_ref.shape[2]
    T = SEQ_LEN
    f32 = jnp.float32

    # (1) All per-timestep input-side gate pre-activations in ONE wide MXU push.
    gxa = (jnp.dot(x_ref[...], gxw_ref[...], preferred_element_type=f32)
           + gxb_ref[...])                                          # (B, T*4H)

    # Per-gate recurrent weights, loaded once.
    whh_i = whh4_ref[0]
    whh_f = whh4_ref[1]
    whh_g = whh4_ref[2]
    whh_o = whh4_ref[3]

    h = jnp.zeros((B, H), f32)
    c = jnp.zeros((B, H), f32)
    h_prev = jnp.zeros((B, H), f32)   # h[t-1]; stays zero for the left conv pad case

    # (2) LSTM recurrence: fully unrolled (T=8, static) so the scheduler sees
    #     across iterations; only the h @ W_hh chain is on the serial path.
    for t in range(T):
        base = t * 4 * H
        gx_i = gxa[:, base + 0 * H: base + 1 * H]
        gx_f = gxa[:, base + 1 * H: base + 2 * H]
        gx_g = gxa[:, base + 2 * H: base + 3 * H]
        gx_o = gxa[:, base + 3 * H: base + 4 * H]
        i_g = jax.nn.sigmoid(gx_i + jnp.dot(h, whh_i, preferred_element_type=f32))
        f_g = jax.nn.sigmoid(gx_f + jnp.dot(h, whh_f, preferred_element_type=f32))
        g_g = jnp.tanh(gx_g + jnp.dot(h, whh_g, preferred_element_type=f32))
        o_g = jax.nn.sigmoid(gx_o + jnp.dot(h, whh_o, preferred_element_type=f32))
        c = f_g * c + i_g * g_g
        h_prev = h
        h = o_g * jnp.tanh(c)

    # (3) Conv1d(k=3, stride=1, pad=1) at the last timestep only (then Identity):
    #     y[T-1] = h[T-2] @ w[0] + h[T-1] @ w[1] + 0 @ w[2] + b
    conv_last = (jnp.dot(h_prev, cw01_ref[0], preferred_element_type=f32)
                 + jnp.dot(h, cw01_ref[1], preferred_element_type=f32)
                 + cb_ref[...])                                     # (B, H)

    # (4) MLP head: Dropout -> Linear -> ReLU -> Dropout -> Linear (dropout = id).
    hid = jnp.maximum(
        jnp.dot(conv_last, w1_ref[...], preferred_element_type=f32) + b1_ref[...],
        0.0)
    o_ref[...] = (jnp.dot(hid, w2_ref[...], preferred_element_type=f32)
                  + b2_ref[...]).astype(o_ref.dtype)


# ---------------- wrapper ----------------

def infer_cell_forward(fused, x):
    B = x.shape[0]
    args = (x, fused["gx_w"], fused["gx_b"], fused["whh4"], fused["cw01"],
            fused["cb"], fused["w1"], fused["b1"], fused["w2"], fused["b2"])
    return pl.pallas_call(
        _infer_cell_fused_kernel,
        out_shape=jax.ShapeDtypeStruct((B, OUTPUT_SIZE), jnp.float32),
        in_specs=[_full_spec(a.shape) for a in args],
        out_specs=_full_spec((B, OUTPUT_SIZE)),
    )(*args)
    # Note: no grid (everything fits in one VMEM-resident invocation, few KB total).
    # For large batch on v7x, add a batch grid with dimension_semantics=("parallel",).


# ---------------- parameters (deterministic synthetic init) ----------------

def init_params(key):
    def nrm(k, shape):
        return (0.1 * jax.random.normal(k, shape)).astype(jnp.float32)

    keys = iter(jax.random.split(key, 32))
    params = {
        # nn.Linear(input_size, seq_len*input_size), weight stored transposed (in, out)
        "expand_w": nrm(next(keys), (INPUT_SIZE, SEQ_LEN * INPUT_SIZE)),
        "expand_b": nrm(next(keys), (1, SEQ_LEN * INPUT_SIZE)),
        # fc head: Linear(H, H*I) then Linear(H*I, OUTPUT_SIZE)
        "w1": nrm(next(keys), (HIDDEN_SIZE, HIDDEN_SIZE * INPUT_SIZE)),
        "b1": nrm(next(keys), (1, HIDDEN_SIZE * INPUT_SIZE)),
        "w2": nrm(next(keys), (HIDDEN_SIZE * INPUT_SIZE, OUTPUT_SIZE)),
        "b2": nrm(next(keys), (1, OUTPUT_SIZE)),
        "cells": [],
    }
    in_dim = INPUT_SIZE
    for op_name, op_params in GENOTYPE:
        if op_name == "LSTM":
            params["cells"].append({
                "wih": nrm(next(keys), (in_dim, 4 * HIDDEN_SIZE)),       # (I, 4H)
                "whh": nrm(next(keys), (HIDDEN_SIZE, 4 * HIDDEN_SIZE)),  # (H, 4H)
                "b": nrm(next(keys), (1, 4 * HIDDEN_SIZE)),              # b_ih + b_hh
            })
            in_dim = HIDDEN_SIZE
        elif op_name == "CNN":
            k = op_params["kernel_size"]
            params["cells"].append({
                "w": nrm(next(keys), (k, in_dim, HIDDEN_SIZE)),          # (K, C_in, C_out)
                "b": nrm(next(keys), (1, HIDDEN_SIZE)),
            })
            in_dim = HIDDEN_SIZE
        else:  # Identity
            params["cells"].append({})
    return params


def prepare_fused_params(params):
    """One-time algebraic folding of expand Linear + LSTM biases into the gate
    pre-activation weights, per-gate split of W_hh, and 2-tap conv weights."""
    I, T, H = INPUT_SIZE, SEQ_LEN, HIDDEN_SIZE
    lstm = params["cells"][0]
    conv = params["cells"][1]
    wih, whh, b_l = lstm["wih"], lstm["whh"], lstm["b"]
    ew, eb = params["expand_w"], params["expand_b"]

    ew_blocks = ew.reshape(I, T, I)                       # W_t = ew[:, t*I:(t+1)*I]
    gx_w = jnp.einsum("itj,jg->itg", ew_blocks, wih,
                      precision=lax.Precision.HIGHEST).reshape(I, T * 4 * H)
    gx_b = (jnp.dot(eb.reshape(T, I), wih,
                    precision=lax.Precision.HIGHEST) + b_l).reshape(1, T * 4 * H)
    whh4 = whh.reshape(H, 4, H).transpose(1, 0, 2)        # (4, H, H), gates [i,f,g,o]
    cw01 = conv["w"][:2]                                  # taps 0,1 -> (2, H, H)

    return {
        "gx_w": gx_w, "gx_b": gx_b, "whh4": whh4,
        "cw01": cw01, "cb": conv["b"],
        "w1": params["w1"], "b1": params["b1"],
        "w2": params["w2"], "b2": params["b2"],
    }


# ---------------- pure-JAX reference (unfused, original structure) ----------------

def _lstm_ref(x_btc, wih, whh, b):
    H = whh.shape[0]
    B = x_btc.shape[0]
    x_tm = jnp.transpose(x_btc, (1, 0, 2))

    def step(carry, x_t):
        h, c = carry
        g = x_t @ wih + h @ whh + b
        i = jax.nn.sigmoid(g[:, :H]); f = jax.nn.sigmoid(g[:, H:2 * H])
        gg = jnp.tanh(g[:, 2 * H:3 * H]); o = jax.nn.sigmoid(g[:, 3 * H:])
        c = f * c + i * gg
        h = o * jnp.tanh(c)
        return (h, c), h

    (_, _), hs = lax.scan(step, (jnp.zeros((B, H)), jnp.zeros((B, H))), x_tm)
    return jnp.transpose(hs, (1, 0, 2))


def _conv_ref(x_btc, w_kco, b):
    B, T, _ = x_btc.shape
    K = w_kco.shape[0]
    xp = jnp.pad(x_btc, ((0, 0), (1, 1), (0, 0)))
    acc = sum(jnp.einsum("btc,co->bto", xp[:, k:k + T, :], w_kco[k]) for k in range(K))
    return acc + b.reshape(1, 1, -1)


def ref_forward(params, x):
    y = x @ params["expand_w"] + params["expand_b"]
    y = y.reshape(x.shape[0], SEQ_LEN, -1)
    for (op_name, _), cp in zip(GENOTYPE, params["cells"]):
        if op_name == "LSTM":
            y = _lstm_ref(y, cp["wih"], cp["whh"], cp["b"])
        elif op_name == "CNN":
            y = _conv_ref(y, cp["w"], cp["b"])
    last = y[:, -1, :]
    h = jnp.maximum(last @ params["w1"] + params["b1"], 0.0)
    return h @ params["w2"] + params["b2"]


if __name__ == "__main__":
    key = jax.random.PRNGKey(0)
    kx, kp = jax.random.split(key)
    params = init_params(kp)
    fused = prepare_fused_params(params)
    x = jax.random.normal(kx, (2, INPUT_SIZE), dtype=jnp.float32)   # (batch, input_size)

    out = jax.block_until_ready(infer_cell_forward(fused, x))
    ref = jax.block_until_ready(ref_forward(params, x))

    assert out.shape == (2, OUTPUT_SIZE)
    np.testing.assert_allclose(np.asarray(out), np.asarray(ref), rtol=2e-3, atol=2e-3)
    print("KERNEL_OK")
</pallas_src>

<mosaic_0001>
module attributes {stable_mosaic.version = 11 : i64} {
  func.func @_infer_cell_fused_kernel(%arg0: memref<2x4xf32, #tpu.memory_space<vmem>>, %arg1: memref<4x1024xf32, #tpu.memory_space<vmem>>, %arg2: memref<1x1024xf32, #tpu.memory_space<vmem>>, %arg3: memref<4x32x32xf32, #tpu.memory_space<vmem>>, %arg4: memref<2x32x32xf32, #tpu.memory_space<vmem>>, %arg5: memref<1x32xf32, #tpu.memory_space<vmem>>, %arg6: memref<32x128xf32, #tpu.memory_space<vmem>>, %arg7: memref<1x128xf32, #tpu.memory_space<vmem>>, %arg8: memref<128x8xf32, #tpu.memory_space<vmem>>, %arg9: memref<1x8xf32, #tpu.memory_space<vmem>>, %arg10: memref<2x8xf32, #tpu.memory_space<vmem>>) attributes {dimension_semantics = [], scalar_prefetch = 0 : i64, scratch_operands = 0 : i64, tpu.core_type = #tpu.core_type<tc>} {
    %c0 = arith.constant 0 : index
    %c0_0 = arith.constant 0 : index
    %0 = vector.load %arg0[%c0, %c0_0] : memref<2x4xf32, #tpu.memory_space<vmem>>, vector<2x4xf32>
    %c0_1 = arith.constant 0 : index
    %c0_2 = arith.constant 0 : index
    %1 = vector.load %arg1[%c0_1, %c0_2] : memref<4x1024xf32, #tpu.memory_space<vmem>>, vector<4x1024xf32>
    %cst = arith.constant dense<0.000000e+00> : vector<2x1024xf32>
    %2 = tpu.matmul %0, %1, %cst {dimension_numbers = #tpu.dot_dimension_numbers<[1], [0], [0], [1], [0, 0, 1, 1], [], []>} : vector<2x4xf32>, vector<4x1024xf32>, vector<2x1024xf32> -> vector<2x1024xf32>
    %c0_3 = arith.constant 0 : index
    %c0_4 = arith.constant 0 : index
    %3 = vector.load %arg2[%c0_3, %c0_4] : memref<1x1024xf32, #tpu.memory_space<vmem>>, vector<1x1024xf32>
    %4 = vector.broadcast %3 : vector<1x1024xf32> to vector<2x1024xf32>
    %5 = arith.addf %2, %4 : vector<2x1024xf32>
    %c0_5 = arith.constant 0 : index
    %c0_6 = arith.constant 0 : index
    %c0_7 = arith.constant 0 : index
    %6 = vector.load %arg3[%c0_5, %c0_6, %c0_7] : memref<4x32x32xf32, #tpu.memory_space<vmem>>, vector<1x32x32xf32>
    %7 = vector.shape_cast %6 : vector<1x32x32xf32> to vector<32x32xf32>
    %c1 = arith.constant 1 : index
    %c0_8 = arith.constant 0 : index
    %c0_9 = arith.constant 0 : index
    %8 = vector.load %arg3[%c1, %c0_8, %c0_9] : memref<4x32x32xf32, #tpu.memory_space<vmem>>, vector<1x32x32xf32>
    %9 = vector.shape_cast %8 : vector<1x32x32xf32> to vector<32x32xf32>
    %c2 = arith.constant 2 : index
    %c0_10 = arith.constant 0 : index
    %c0_11 = arith.constant 0 : index
    %10 = vector.load %arg3[%c2, %c0_10, %c0_11] : memref<4x32x32xf32, #tpu.memory_space<vmem>>, vector<1x32x32xf32>
    %11 = vector.shape_cast %10 : vector<1x32x32xf32> to vector<32x32xf32>
    %c3 = arith.constant 3 : index
    %c0_12 = arith.constant 0 : index
    %c0_13 = arith.constant 0 : index
    %12 = vector.load %arg3[%c3, %c0_12, %c0_13] : memref<4x32x32xf32, #tpu.memory_space<vmem>>, vector<1x32x32xf32>
    %13 = vector.shape_cast %12 : vector<1x32x32xf32> to vector<32x32xf32>
    %cst_14 = arith.constant 0.000000e+00 : f32
    %14 = vector.broadcast %cst_14 : f32 to vector<2x32xf32>
    %cst_15 = arith.constant 0.000000e+00 : f32
    %15 = vector.broadcast %cst_15 : f32 to vector<2x32xf32>
    %16 = vector.extract_strided_slice %5 {offsets = [0, 0], sizes = [2, 32], strides = [1, 1]} : vector<2x1024xf32> to vector<2x32xf32>
    %17 = vector.extract_strided_slice %5 {offsets = [0, 32], sizes = [2, 32], strides = [1, 1]} : vector<2x1024xf32> to vector<2x32xf32>
    %18 = vector.extract_strided_slice %5 {offsets = [0, 64], sizes = [2, 32], strides = [1, 1]} : vector<2x1024xf32> to vector<2x32xf32>
    %19 = vector.extract_strided_slice %5 {offsets = [0, 96], sizes = [2, 32], strides = [1, 1]} : vector<2x1024xf32> to vector<2x32xf32>
    %cst_16 = arith.constant dense<0.000000e+00> : vector<2x32xf32>
    %20 = tpu.matmul %14, %7, %cst_16 {dimension_numbers = #tpu.dot_dimension_numbers<[1], [0], [0], [1], [0, 0, 1, 1], [], []>} : vector<2x32xf32>, vector<32x32xf32>, vector<2x32xf32> -> vector<2x32xf32>
    %21 = arith.addf %16, %20 : vector<2x32xf32>
    %22 = arith.negf %21 : vector<2x32xf32>
    %23 = math.exp %22 : vector<2x32xf32>
    %cst_17 = arith.constant 1.000000e+00 : f32
    %24 = vector.broadcast %cst_17 : f32 to vector<2x32xf32>
    %25 = arith.addf %24, %23 : vector<2x32xf32>
    %26 = arith.divf %24, %25 : vector<2x32xf32>
    %cst_18 = arith.constant dense<0.000000e+00> : vector<2x32xf32>
    %27 = tpu.matmul %14, %9, %cst_18 {dimension_numbers = #tpu.dot_dimension_numbers<[1], [0], [0], [1], [0, 0, 1, 1], [], []>} : vector<2x32xf32>, vector<32x32xf32>, vector<2x32xf32> -> vector<2x32xf32>
    %28 = arith.addf %17, %27 : vector<2x32xf32>
    %29 = arith.negf %28 : vector<2x32xf32>
    %30 = math.exp %29 : vector<2x32xf32>
    %cst_19 = arith.constant 1.000000e+00 : f32
    %31 = vector.broadcast %cst_19 : f32 to vector<2x32xf32>
    %32 = arith.addf %31, %30 : vector<2x32xf32>
    %33 = arith.divf %31, %32 : vector<2x32xf32>
    %cst_20 = arith.constant dense<0.000000e+00> : vector<2x32xf32>
    %34 = tpu.matmul %14, %11, %cst_20 {dimension_numbers = #tpu.dot_dimension_numbers<[1], [0], [0], [1], [0, 0, 1, 1], [], []>} : vector<2x32xf32>, vector<32x32xf32>, vector<2x32xf32> -> vector<2x32xf32>
    %35 = arith.addf %18, %34 : vector<2x32xf32>
    %36 = math.tanh %35 : vector<2x32xf32>
    %cst_21 = arith.constant dense<0.000000e+00> : vector<2x32xf32>
    %37 = tpu.matmul %14, %13, %cst_21 {dimension_numbers = #tpu.dot_dimension_numbers<[1], [0], [0], [1], [0, 0, 1, 1], [], []>} : vector<2x32xf32>, vector<32x32xf32>, vector<2x32xf32> -> vector<2x32xf32>
    %38 = arith.addf %19, %37 : vector<2x32xf32>
    %39 = arith.negf %38 : vector<2x32xf32>
    %40 = math.exp %39 : vector<2x32xf32>
    %cst_22 = arith.constant 1.000000e+00 : f32
    %41 = vector.broadcast %cst_22 : f32 to vector<2x32xf32>
    %42 = arith.addf %41, %40 : vector<2x32xf32>
    %43 = arith.divf %41, %42 : vector<2x32xf32>
    %44 = arith.mulf %33, %15 : vector<2x32xf32>
    %45 = arith.mulf %26, %36 : vector<2x32xf32>
    %46 = arith.addf %44, %45 : vector<2x32xf32>
    %47 = math.tanh %46 : vector<2x32xf32>
    %48 = arith.mulf %43, %47 : vector<2x32xf32>
    %49 = vector.extract_strided_slice %5 {offsets = [0, 128], sizes = [2, 32], strides = [1, 1]} : vector<2x1024xf32> to vector<2x32xf32>
    %50 = vector.extract_strided_slice %5 {offsets = [0, 160], sizes = [2, 32], strides = [1, 1]} : vector<2x1024xf32> to vector<2x32xf32>
    %51 = vector.extract_strided_slice %5 {offsets = [0, 192], sizes = [2, 32], strides = [1, 1]} : vector<2x1024xf32> to vector<2x32xf32>
    %52 = vector.extract_strided_slice %5 {offsets = [0, 224], sizes = [2, 32], strides = [1, 1]} : vector<2x1024xf32> to vector<2x32xf32>
    %cst_23 = arith.constant dense<0.000000e+00> : vector<2x32xf32>
    %53 = tpu.matmul %48, %7, %cst_23 {dimension_numbers = #tpu.dot_dimension_numbers<[1], [0], [0], [1], [0, 0, 1, 1], [], []>} : vector<2x32xf32>, vector<32x32xf32>, vector<2x32xf32> -> vector<2x32xf32>
    %54 = arith.addf %49, %53 : vector<2x32xf32>
    %55 = arith.negf %54 : vector<2x32xf32>
    %56 = math.exp %55 : vector<2x32xf32>
    %cst_24 = arith.constant 1.000000e+00 : f32
    %57 = vector.broadcast %cst_24 : f32 to vector<2x32xf32>
    %58 = arith.addf %57, %56 : vector<2x32xf32>
    %59 = arith.divf %57, %58 : vector<2x32xf32>
    %cst_25 = arith.constant dense<0.000000e+00> : vector<2x32xf32>
    %60 = tpu.matmul %48, %9, %cst_25 {dimension_numbers = #tpu.dot_dimension_numbers<[1], [0], [0], [1], [0, 0, 1, 1], [], []>} : vector<2x32xf32>, vector<32x32xf32>, vector<2x32xf32> -> vector<2x32xf32>
    %61 = arith.addf %50, %60 : vector<2x32xf32>
    %62 = arith.negf %61 : vector<2x32xf32>
    %63 = math.exp %62 : vector<2x32xf32>
    %cst_26 = arith.constant 1.000000e+00 : f32
    %64 = vector.broadcast %cst_26 : f32 to vector<2x32xf32>
    %65 = arith.addf %64, %63 : vector<2x32xf32>
    %66 = arith.divf %64, %65 : vector<2x32xf32>
    %cst_27 = arith.constant dense<0.000000e+00> : vector<2x32xf32>
    %67 = tpu.matmul %48, %11, %cst_27 {dimension_numbers = #tpu.dot_dimension_numbers<[1], [0], [0], [1], [0, 0, 1, 1], [], []>} : vector<2x32xf32>, vector<32x32xf32>, vector<2x32xf32> -> vector<2x32xf32>
    %68 = arith.addf %51, %67 : vector<2x32xf32>
    %69 = math.tanh %68 : vector<2x32xf32>
    %cst_28 = arith.constant dense<0.000000e+00> : vector<2x32xf32>
    %70 = tpu.matmul %48, %13, %cst_28 {dimension_numbers = #tpu.dot_dimension_numbers<[1], [0], [0], [1], [0, 0, 1, 1], [], []>} : vector<2x32xf32>, vector<32x32xf32>, vector<2x32xf32> -> vector<2x32xf32>
    %71 = arith.addf %52, %70 : vector<2x32xf32>
    %72 = arith.negf %71 : vector<2x32xf32>
    %73 = math.exp %72 : vector<2x32xf32>
    %cst_29 = arith.constant 1.000000e+00 : f32
    %74 = vector.broadcast %cst_29 : f32 to vector<2x32xf32>
    %75 = arith.addf %74, %73 : vector<2x32xf32>
    %76 = arith.divf %74, %75 : vector<2x32xf32>
    %77 = arith.mulf %66, %46 : vector<2x32xf32>
    %78 = arith.mulf %59, %69 : vector<2x32xf32>
    %79 = arith.addf %77, %78 : vector<2x32xf32>
    %80 = math.tanh %79 : vector<2x32xf32>
    %81 = arith.mulf %76, %80 : vector<2x32xf32>
    %82 = vector.extract_strided_slice %5 {offsets = [0, 256], sizes = [2, 32], strides = [1, 1]} : vector<2x1024xf32> to vector<2x32xf32>
    %83 = vector.extract_strided_slice %5 {offsets = [0, 288], sizes = [2, 32], strides = [1, 1]} : vector<2x1024xf32> to vector<2x32xf32>
    %84 = vector.extract_strided_slice %5 {offsets = [0, 320], sizes = [2, 32], strides = [1, 1]} : vector<2x1024xf32> to vector<2x32xf32>
    %85 = vector.extract_strided_slice %5 {offsets = [0, 352], sizes = [2, 32], strides = [1, 1]} : vector<2x1024xf32> to vector<2x32xf32>
    %cst_30 = arith.constant dense<0.000000e+00> : vector<2x32xf32>
    %86 = tpu.matmul %81, %7, %cst_30 {dimension_numbers = #tpu.dot_dimension_numbers<[1], [0], [0], [1], [0, 0, 1, 1], [], []>} : vector<2x32xf32>, vector<32x32xf32>, vector<2x32xf32> -> vector<2x32xf32>
    %87 = arith.addf %82, %86 : vector<2x32xf32>
    %88 = arith.negf %87 : vector<2x32xf32>
    %89 = math.exp %88 : vector<2x32xf32>
    %cst_31 = arith.constant 1.000000e+00 : f32
    %90 = vector.broadcast %cst_31 : f32 to vector<2x32xf32>
    %91 = arith.addf %90, %89 : vector<2x32xf32>
    %92 = arith.divf %90, %91 : vector<2x32xf32>
    %cst_32 = arith.constant dense<0.000000e+00> : vector<2x32xf32>
    %93 = tpu.matmul %81, %9, %cst_32 {dimension_numbers = #tpu.dot_dimension_numbers<[1], [0], [0], [1], [0, 0, 1, 1], [], []>} : vector<2x32xf32>, vector<32x32xf32>, vector<2x32xf32> -> vector<2x32xf32>
    %94 = arith.addf %83, %93 : vector<2x32xf32>
    %95 = arith.negf %94 : vector<2x32xf32>
    %96 = math.exp %95 : vector<2x32xf32>
    %cst_33 = arith.constant 1.000000e+00 : f32
    %97 = vector.broadcast %cst_33 : f32 to vector<2x32xf32>
    %98 = arith.addf %97, %96 : vector<2x32xf32>
    %99 = arith.divf %97, %98 : vector<2x32xf32>
    %cst_34 = arith.constant dense<0.000000e+00> : vector<2x32xf32>
    %100 = tpu.matmul %81, %11, %cst_34 {dimension_numbers = #tpu.dot_dimension_numbers<[1], [0], [0], [1], [0, 0, 1, 1], [], []>} : vector<2x32xf32>, vector<32x32xf32>, vector<2x32xf32> -> vector<2x32xf32>
    %101 = arith.addf %84, %100 : vector<2x32xf32>
    %102 = math.tanh %101 : vector<2x32xf32>
    %cst_35 = arith.constant dense<0.000000e+00> : vector<2x32xf32>
    %103 = tpu.matmul %81, %13, %cst_35 {dimension_numbers = #tpu.dot_dimension_numbers<[1], [0], [0], [1], [0, 0, 1, 1], [], []>} : vector<2x32xf32>, vector<32x32xf32>, vector<2x32xf32> -> vector<2x32xf32>
    %104 = arith.addf %85, %103 : vector<2x32xf32>
    %105 = arith.negf %104 : vector<2x32xf32>
    %106 = math.exp %105 : vector<2x32xf32>
    %cst_36 = arith.constant 1.000000e+00 : f32
    %107 = vector.broadcast %cst_36 : f32 to vector<2x32xf32>
    %108 = arith.addf %107, %106 : vector<2x32xf32>
    %109 = arith.divf %107, %108 : vector<2x32xf32>
    %110 = arith.mulf %99, %79 : vector<2x32xf32>
    %111 = arith.mulf %92, %102 : vector<2x32xf32>
    %112 = arith.addf %110, %111 : vector<2x32xf32>
    %113 = math.tanh %112 : vector<2x32xf32>
    %114 = arith.mulf %109, %113 : vector<2x32xf32>
    %115 = vector.extract_strided_slice %5 {offsets = [0, 384], sizes = [2, 32], strides = [1, 1]} : vector<2x1024xf32> to vector<2x32xf32>
    %116 = vector.extract_strided_slice %5 {offsets = [0, 416], sizes = [2, 32], strides = [1, 1]} : vector<2x1024xf32> to vector<2x32xf32>
    %117 = vector.extract_strided_slice %5 {offsets = [0, 448], sizes = [2, 32], strides = [1, 1]} : vector<2x1024xf32> to vector<2x32xf32>
    %118 = vector.extract_strided_slice %5 {offsets = [0, 480], sizes = [2, 32], strides = [1, 1]} : vector<2x1024xf32> to vector<2x32xf32>
    %cst_37 = arith.constant dense<0.000000e+00> : vector<2x32xf32>
    %119 = tpu.matmul %114, %7, %cst_37 {dimension_numbers = #tpu.dot_dimension_numbers<[1], [0], [0], [1], [0, 0, 1, 1], [], []>} : vector<2x32xf32>, vector<32x32xf32>, vector<2x32xf32> -> vector<2x32xf32>
    %120 = arith.addf %115, %119 : vector<2x32xf32>
    %121 = arith.negf %120 : vector<2x32xf32>
    %122 = math.exp %121 : vector<2x32xf32>
    %cst_38 = arith.constant 1.000000e+00 : f32
    %123 = vector.broadcast %cst_38 : f32 to vector<2x32xf32>
    %124 = arith.addf %123, %122 : vector<2x32xf32>
    %125 = arith.divf %123, %124 : vector<2x32xf32>
    %cst_39 = arith.constant dense<0.000000e+00> : vector<2x32xf32>
    %126 = tpu.matmul %114, %9, %cst_39 {dimension_numbers = #tpu.dot_dimension_numbers<[1], [0], [0], [1], [0, 0, 1, 1], [], []>} : vector<2x32xf32>, vector<32x32xf32>, vector<2x32xf32> -> vector<2x32xf32>
    %127 = arith.addf %116, %126 : vector<2x32xf32>
    %128 = arith.negf %127 : vector<2x32xf32>
    %129 = math.exp %128 : vector<2x32xf32>
    %cst_40 = arith.constant 1.000000e+00 : f32
    %130 = vector.broadcast %cst_40 : f32 to vector<2x32xf32>
    %131 = arith.addf %130, %129 : vector<2x32xf32>
    %132 = arith.divf %130, %131 : vector<2x32xf32>
    %cst_41 = arith.constant dense<0.000000e+00> : vector<2x32xf32>
    %133 = tpu.matmul %114, %11, %cst_41 {dimension_numbers = #tpu.dot_dimension_numbers<[1], [0], [0], [1], [0, 0, 1, 1], [], []>} : vector<2x32xf32>, vector<32x32xf32>, vector<2x32xf32> -> vector<2x32xf32>
    %134 = arith.addf %117, %133 : vector<2x32xf32>
    %135 = math.tanh %134 : vector<2x32xf32>
    %cst_42 = arith.constant dense<0.000000e+00> : vector<2x32xf32>
    %136 = tpu.matmul %114, %13, %cst_42 {dimension_numbers = #tpu.dot_dimension_numbers<[1], [0], [0], [1], [0, 0, 1, 1], [], []>} : vector<2x32xf32>, vector<32x32xf32>, vector<2x32xf32> -> vector<2x32xf32>
    %137 = arith.addf %118, %136 : vector<2x32xf32>
    %138 = arith.negf %137 : vector<2x32xf32>
    %139 = math.exp %138 : vector<2x32xf32>
    %cst_43 = arith.constant 1.000000e+00 : f32
    %140 = vector.broadcast %cst_43 : f32 to vector<2x32xf32>
    %141 = arith.addf %140, %139 : vector<2x32xf32>
    %142 = arith.divf %140, %141 : vector<2x32xf32>
    %143 = arith.mulf %132, %112 : vector<2x32xf32>
    %144 = arith.mulf %125, %135 : vector<2x32xf32>
    %145 = arith.addf %143, %144 : vector<2x32xf32>
    %146 = math.tanh %145 : vector<2x32xf32>
    %147 = arith.mulf %142, %146 : vector<2x32xf32>
    %148 = vector.extract_strided_slice %5 {offsets = [0, 512], sizes = [2, 32], strides = [1, 1]} : vector<2x1024xf32> to vector<2x32xf32>
    %149 = vector.extract_strided_slice %5 {offsets = [0, 544], sizes = [2, 32], strides = [1, 1]} : vector<2x1024xf32> to vector<2x32xf32>
    %150 = vector.extract_strided_slice %5 {offsets = [0, 576], sizes = [2, 32], strides = [1, 1]} : vector<2x1024xf32> to vector<2x32xf32>
    %151 = vector.extract_strided_slice %5 {offsets = [0, 608], sizes = [2, 32], strides = [1, 1]} : vector<2x1024xf32> to vector<2x32xf32>
    %cst_44 = arith.constant dense<0.000000e+00> : vector<2x32xf32>
    %152 = tpu.matmul %147, %7, %cst_44 {dimension_numbers = #tpu.dot_dimension_numbers<[1], [0], [0], [1], [0, 0, 1, 1], [], []>} : vector<2x32xf32>, vector<32x32xf32>, vector<2x32xf32> -> vector<2x32xf32>
    %153 = arith.addf %148, %152 : vector<2x32xf32>
    %154 = arith.negf %153 : vector<2x32xf32>
    %155 = math.exp %154 : vector<2x32xf32>
    %cst_45 = arith.constant 1.000000e+00 : f32
    %156 = vector.broadcast %cst_45 : f32 to vector<2x32xf32>
    %157 = arith.addf %156, %155 : vector<2x32xf32>
    %158 = arith.divf %156, %157 : vector<2x32xf32>
    %cst_46 = arith.constant dense<0.000000e+00> : vector<2x32xf32>
    %159 = tpu.matmul %147, %9, %cst_46 {dimension_numbers = #tpu.dot_dimension_numbers<[1], [0], [0], [1], [0, 0, 1, 1], [], []>} : vector<2x32xf32>, vector<32x32xf32>, vector<2x32xf32> -> vector<2x32xf32>
    %160 = arith.addf %149, %159 : vector<2x32xf32>
    %161 = arith.negf %160 : vector<2x32xf32>
    %162 = math.exp %161 : vector<2x32xf32>
    %cst_47 = arith.constant 1.000000e+00 : f32
    %163 = vector.broadcast %cst_47 : f32 to vector<2x32xf32>
    %164 = arith.addf %163, %162 : vector<2x32xf32>
    %165 = arith.divf %163, %164 : vector<2x32xf32>
    %cst_48 = arith.constant dense<0.000000e+00> : vector<2x32xf32>
    %166 = tpu.matmul %147, %11, %cst_48 {dimension_numbers = #tpu.dot_dimension_numbers<[1], [0], [0], [1], [0, 0, 1, 1], [], []>} : vector<2x32xf32>, vector<32x32xf32>, vector<2x32xf32> -> vector<2x32xf32>
    %167 = arith.addf %150, %166 : vector<2x32xf32>
    %168 = math.tanh %167 : vector<2x32xf32>
    %cst_49 = arith.constant dense<0.000000e+00> : vector<2x32xf32>
    %169 = tpu.matmul %147, %13, %cst_49 {dimension_numbers = #tpu.dot_dimension_numbers<[1], [0], [0], [1], [0, 0, 1, 1], [], []>} : vector<2x32xf32>, vector<32x32xf32>, vector<2x32xf32> -> vector<2x32xf32>
    %170 = arith.addf %151, %169 : vector<2x32xf32>
    %171 = arith.negf %170 : vector<2x32xf32>
    %172 = math.exp %171 : vector<2x32xf32>
    %cst_50 = arith.constant 1.000000e+00 : f32
    %173 = vector.broadcast %cst_50 : f32 to vector<2x32xf32>
    %174 = arith.addf %173, %172 : vector<2x32xf32>
    %175 = arith.divf %173, %174 : vector<2x32xf32>
    %176 = arith.mulf %165, %145 : vector<2x32xf32>
    %177 = arith.mulf %158, %168 : vector<2x32xf32>
    %178 = arith.addf %176, %177 : vector<2x32xf32>
    %179 = math.tanh %178 : vector<2x32xf32>
    %180 = arith.mulf %175, %179 : vector<2x32xf32>
    %181 = vector.extract_strided_slice %5 {offsets = [0, 640], sizes = [2, 32], strides = [1, 1]} : vector<2x1024xf32> to vector<2x32xf32>
    %182 = vector.extract_strided_slice %5 {offsets = [0, 672], sizes = [2, 32], strides = [1, 1]} : vector<2x1024xf32> to vector<2x32xf32>
    %183 = vector.extract_strided_slice %5 {offsets = [0, 704], sizes = [2, 32], strides = [1, 1]} : vector<2x1024xf32> to vector<2x32xf32>
    %184 = vector.extract_strided_slice %5 {offsets = [0, 736], sizes = [2, 32], strides = [1, 1]} : vector<2x1024xf32> to vector<2x32xf32>
    %cst_51 = arith.constant dense<0.000000e+00> : vector<2x32xf32>
    %185 = tpu.matmul %180, %7, %cst_51 {dimension_numbers = #tpu.dot_dimension_numbers<[1], [0], [0], [1], [0, 0, 1, 1], [], []>} : vector<2x32xf32>, vector<32x32xf32>, vector<2x32xf32> -> vector<2x32xf32>
    %186 = arith.addf %181, %185 : vector<2x32xf32>
    %187 = arith.negf %186 : vector<2x32xf32>
    %188 = math.exp %187 : vector<2x32xf32>
    %cst_52 = arith.constant 1.000000e+00 : f32
    %189 = vector.broadcast %cst_52 : f32 to vector<2x32xf32>
    %190 = arith.addf %189, %188 : vector<2x32xf32>
    %191 = arith.divf %189, %190 : vector<2x32xf32>
    %cst_53 = arith.constant dense<0.000000e+00> : vector<2x32xf32>
    %192 = tpu.matmul %180, %9, %cst_53 {dimension_numbers = #tpu.dot_dimension_numbers<[1], [0], [0], [1], [0, 0, 1, 1], [], []>} : vector<2x32xf32>, vector<32x32xf32>, vector<2x32xf32> -> vector<2x32xf32>
    %193 = arith.addf %182, %192 : vector<2x32xf32>
    %194 = arith.negf %193 : vector<2x32xf32>
    %195 = math.exp %194 : vector<2x32xf32>
    %cst_54 = arith.constant 1.000000e+00 : f32
    %196 = vector.broadcast %cst_54 : f32 to vector<2x32xf32>
    %197 = arith.addf %196, %195 : vector<2x32xf32>
    %198 = arith.divf %196, %197 : vector<2x32xf32>
    %cst_55 = arith.constant dense<0.000000e+00> : vector<2x32xf32>
    %199 = tpu.matmul %180, %11, %cst_55 {dimension_numbers = #tpu.dot_dimension_numbers<[1], [0], [0], [1], [0, 0, 1, 1], [], []>} : vector<2x32xf32>, vector<32x32xf32>, vector<2x32xf32> -> vector<2x32xf32>
    %200 = arith.addf %183, %199 : vector<2x32xf32>
    %201 = math.tanh %200 : vector<2x32xf32>
    %cst_56 = arith.constant dense<0.000000e+00> : vector<2x32xf32>
    %202 = tpu.matmul %180, %13, %cst_56 {dimension_numbers = #tpu.dot_dimension_numbers<[1], [0], [0], [1], [0, 0, 1, 1], [], []>} : vector<2x32xf32>, vector<32x32xf32>, vector<2x32xf32> -> vector<2x32xf32>
    %203 = arith.addf %184, %202 : vector<2x32xf32>
    %204 = arith.negf %203 : vector<2x32xf32>
    %205 = math.exp %204 : vector<2x32xf32>
    %cst_57 = arith.constant 1.000000e+00 : f32
    %206 = vector.broadcast %cst_57 : f32 to vector<2x32xf32>
    %207 = arith.addf %206, %205 : vector<2x32xf32>
    %208 = arith.divf %206, %207 : vector<2x32xf32>
    %209 = arith.mulf %198, %178 : vector<2x32xf32>
    %210 = arith.mulf %191, %201 : vector<2x32xf32>
    %211 = arith.addf %209, %210 : vector<2x32xf32>
    %212 = math.tanh %211 : vector<2x32xf32>
    %213 = arith.mulf %208, %212 : vector<2x32xf32>
    %214 = vector.extract_strided_slice %5 {offsets = [0, 768], sizes = [2, 32], strides = [1, 1]} : vector<2x1024xf32> to vector<2x32xf32>
    %215 = vector.extract_strided_slice %5 {offsets = [0, 800], sizes = [2, 32], strides = [1, 1]} : vector<2x1024xf32> to vector<2x32xf32>
    %216 = vector.extract_strided_slice %5 {offsets = [0, 832], sizes = [2, 32], strides = [1, 1]} : vector<2x1024xf32> to vector<2x32xf32>
    %217 = vector.extract_strided_slice %5 {offsets = [0, 864], sizes = [2, 32], strides = [1, 1]} : vector<2x1024xf32> to vector<2x32xf32>
    %cst_58 = arith.constant dense<0.000000e+00> : vector<2x32xf32>
    %218 = tpu.matmul %213, %7, %cst_58 {dimension_numbers = #tpu.dot_dimension_numbers<[1], [0], [0], [1], [0, 0, 1, 1], [], []>} : vector<2x32xf32>, vector<32x32xf32>, vector<2x32xf32> -> vector<2x32xf32>
    %219 = arith.addf %214, %218 : vector<2x32xf32>
    %220 = arith.negf %219 : vector<2x32xf32>
    %221 = math.exp %220 : vector<2x32xf32>
    %cst_59 = arith.constant 1.000000e+00 : f32
    %222 = vector.broadcast %cst_59 : f32 to vector<2x32xf32>
    %223 = arith.addf %222, %221 : vector<2x32xf32>
    %224 = arith.divf %222, %223 : vector<2x32xf32>
    %cst_60 = arith.constant dense<0.000000e+00> : vector<2x32xf32>
    %225 = tpu.matmul %213, %9, %cst_60 {dimension_numbers = #tpu.dot_dimension_numbers<[1], [0], [0], [1], [0, 0, 1, 1], [], []>} : vector<2x32xf32>, vector<32x32xf32>, vector<2x32xf32> -> vector<2x32xf32>
    %226 = arith.addf %215, %225 : vector<2x32xf32>
    %227 = arith.negf %226 : vector<2x32xf32>
    %228 = math.exp %227 : vector<2x32xf32>
    %cst_61 = arith.constant 1.000000e+00 : f32
    %229 = vector.broadcast %cst_61 : f32 to vector<2x32xf32>
    %230 = arith.addf %229, %228 : vector<2x32xf32>
    %231 = arith.divf %229, %230 : vector<2x32xf32>
    %cst_62 = arith.constant dense<0.000000e+00> : vector<2x32xf32>
    %232 = tpu.matmul %213, %11, %cst_62 {dimension_numbers = #tpu.dot_dimension_numbers<[1], [0], [0], [1], [0, 0, 1, 1], [], []>} : vector<2x32xf32>, vector<32x32xf32>, vector<2x32xf32> -> vector<2x32xf32>
    %233 = arith.addf %216, %232 : vector<2x32xf32>
    %234 = math.tanh %233 : vector<2x32xf32>
    %cst_63 = arith.constant dense<0.000000e+00> : vector<2x32xf32>
    %235 = tpu.matmul %213, %13, %cst_63 {dimension_numbers = #tpu.dot_dimension_numbers<[1], [0], [0], [1], [0, 0, 1, 1], [], []>} : vector<2x32xf32>, vector<32x32xf32>, vector<2x32xf32> -> vector<2x32xf32>
    %236 = arith.addf %217, %235 : vector<2x32xf32>
    %237 = arith.negf %236 : vector<2x32xf32>
    %238 = math.exp %237 : vector<2x32xf32>
    %cst_64 = arith.constant 1.000000e+00 : f32
    %239 = vector.broadcast %cst_64 : f32 to vector<2x32xf32>
    %240 = arith.addf %239, %238 : vector<2x32xf32>
    %241 = arith.divf %239, %240 : vector<2x32xf32>
    %242 = arith.mulf %231, %211 : vector<2x32xf32>
    %243 = arith.mulf %224, %234 : vector<2x32xf32>
    %244 = arith.addf %242, %243 : vector<2x32xf32>
    %245 = math.tanh %244 : vector<2x32xf32>
    %246 = arith.mulf %241, %245 : vector<2x32xf32>
    %247 = vector.extract_strided_slice %5 {offsets = [0, 896], sizes = [2, 32], strides = [1, 1]} : vector<2x1024xf32> to vector<2x32xf32>
    %248 = vector.extract_strided_slice %5 {offsets = [0, 928], sizes = [2, 32], strides = [1, 1]} : vector<2x1024xf32> to vector<2x32xf32>
    %249 = vector.extract_strided_slice %5 {offsets = [0, 960], sizes = [2, 32], strides = [1, 1]} : vector<2x1024xf32> to vector<2x32xf32>
    %250 = vector.extract_strided_slice %5 {offsets = [0, 992], sizes = [2, 32], strides = [1, 1]} : vector<2x1024xf32> to vector<2x32xf32>
    %cst_65 = arith.constant dense<0.000000e+00> : vector<2x32xf32>
    %251 = tpu.matmul %246, %7, %cst_65 {dimension_numbers = #tpu.dot_dimension_numbers<[1], [0], [0], [1], [0, 0, 1, 1], [], []>} : vector<2x32xf32>, vector<32x32xf32>, vector<2x32xf32> -> vector<2x32xf32>
    %252 = arith.addf %247, %251 : vector<2x32xf32>
    %253 = arith.negf %252 : vector<2x32xf32>
    %254 = math.exp %253 : vector<2x32xf32>
    %cst_66 = arith.constant 1.000000e+00 : f32
    %255 = vector.broadcast %cst_66 : f32 to vector<2x32xf32>
    %256 = arith.addf %255, %254 : vector<2x32xf32>
    %257 = arith.divf %255, %256 : vector<2x32xf32>
    %cst_67 = arith.constant dense<0.000000e+00> : vector<2x32xf32>
    %258 = tpu.matmul %246, %9, %cst_67 {dimension_numbers = #tpu.dot_dimension_numbers<[1], [0], [0], [1], [0, 0, 1, 1], [], []>} : vector<2x32xf32>, vector<32x32xf32>, vector<2x32xf32> -> vector<2x32xf32>
    %259 = arith.addf %248, %258 : vector<2x32xf32>
    %260 = arith.negf %259 : vector<2x32xf32>
    %261 = math.exp %260 : vector<2x32xf32>
    %cst_68 = arith.constant 1.000000e+00 : f32
    %262 = vector.broadcast %cst_68 : f32 to vector<2x32xf32>
    %263 = arith.addf %262, %261 : vector<2x32xf32>
    %264 = arith.divf %262, %263 : vector<2x32xf32>
    %cst_69 = arith.constant dense<0.000000e+00> : vector<2x32xf32>
    %265 = tpu.matmul %246, %11, %cst_69 {dimension_numbers = #tpu.dot_dimension_numbers<[1], [0], [0], [1], [0, 0, 1, 1], [], []>} : vector<2x32xf32>, vector<32x32xf32>, vector<2x32xf32> -> vector<2x32xf32>
    %266 = arith.addf %249, %265 : vector<2x32xf32>
    %267 = math.tanh %266 : vector<2x32xf32>
    %cst_70 = arith.constant dense<0.000000e+00> : vector<2x32xf32>
    %268 = tpu.matmul %246, %13, %cst_70 {dimension_numbers = #tpu.dot_dimension_numbers<[1], [0], [0], [1], [0, 0, 1, 1], [], []>} : vector<2x32xf32>, vector<32x32xf32>, vector<2x32xf32> -> vector<2x32xf32>
    %269 = arith.addf %250, %268 : vector<2x32xf32>
    %270 = arith.negf %269 : vector<2x32xf32>
    %271 = math.exp %270 : vector<2x32xf32>
    %cst_71 = arith.constant 1.000000e+00 : f32
    %272 = vector.broadcast %cst_71 : f32 to vector<2x32xf32>
    %273 = arith.addf %272, %271 : vector<2x32xf32>
    %274 = arith.divf %272, %273 : vector<2x32xf32>
    %275 = arith.mulf %264, %244 : vector<2x32xf32>
    %276 = arith.mulf %257, %267 : vector<2x32xf32>
    %277 = arith.addf %275, %276 : vector<2x32xf32>
    %278 = math.tanh %277 : vector<2x32xf32>
    %279 = arith.mulf %274, %278 : vector<2x32xf32>
    %c0_72 = arith.constant 0 : index
    %c0_73 = arith.constant 0 : index
    %c0_74 = arith.constant 0 : index
    %280 = vector.load %arg4[%c0_72, %c0_73, %c0_74] : memref<2x32x32xf32, #tpu.memory_space<vmem>>, vector<1x32x32xf32>
    %281 = vector.shape_cast %280 : vector<1x32x32xf32> to vector<32x32xf32>
    %cst_75 = arith.constant dense<0.000000e+00> : vector<2x32xf32>
    %282 = tpu.matmul %246, %281, %cst_75 {dimension_numbers = #tpu.dot_dimension_numbers<[1], [0], [0], [1], [0, 0, 1, 1], [], []>} : vector<2x32xf32>, vector<32x32xf32>, vector<2x32xf32> -> vector<2x32xf32>
    %c1_76 = arith.constant 1 : index
    %c0_77 = arith.constant 0 : index
    %c0_78 = arith.constant 0 : index
    %283 = vector.load %arg4[%c1_76, %c0_77, %c0_78] : memref<2x32x32xf32, #tpu.memory_space<vmem>>, vector<1x32x32xf32>
    %284 = vector.shape_cast %283 : vector<1x32x32xf32> to vector<32x32xf32>
    %cst_79 = arith.constant dense<0.000000e+00> : vector<2x32xf32>
    %285 = tpu.matmul %279, %284, %cst_79 {dimension_numbers = #tpu.dot_dimension_numbers<[1], [0], [0], [1], [0, 0, 1, 1], [], []>} : vector<2x32xf32>, vector<32x32xf32>, vector<2x32xf32> -> vector<2x32xf32>
    %286 = arith.addf %282, %285 : vector<2x32xf32>
    %c0_80 = arith.constant 0 : index
    %c0_81 = arith.constant 0 : index
    %287 = vector.load %arg5[%c0_80, %c0_81] : memref<1x32xf32, #tpu.memory_space<vmem>>, vector<1x32xf32>
    %288 = vector.broadcast %287 : vector<1x32xf32> to vector<2x32xf32>
    %289 = arith.addf %286, %288 : vector<2x32xf32>
    %c0_82 = arith.constant 0 : index
    %c0_83 = arith.constant 0 : index
    %290 = vector.load %arg6[%c0_82, %c0_83] : memref<32x128xf32, #tpu.memory_space<vmem>>, vector<32x128xf32>
    %cst_84 = arith.constant dense<0.000000e+00> : vector<2x128xf32>
    %291 = tpu.matmul %289, %290, %cst_84 {dimension_numbers = #tpu.dot_dimension_numbers<[1], [0], [0], [1], [0, 0, 1, 1], [], []>} : vector<2x32xf32>, vector<32x128xf32>, vector<2x128xf32> -> vector<2x128xf32>
    %c0_85 = arith.constant 0 : index
    %c0_86 = arith.constant 0 : index
    %292 = vector.load %arg7[%c0_85, %c0_86] : memref<1x128xf32, #tpu.memory_space<vmem>>, vector<1x128xf32>
    %293 = vector.broadcast %292 : vector<1x128xf32> to vector<2x128xf32>
    %294 = arith.addf %291, %293 : vector<2x128xf32>
    %cst_87 = arith.constant 0.000000e+00 : f32
    %295 = vector.broadcast %cst_87 : f32 to vector<2x128xf32>
    %296 = arith.maximumf %294, %295 : vector<2x128xf32>
    %c0_88 = arith.constant 0 : index
    %c0_89 = arith.constant 0 : index
    %297 = vector.load %arg8[%c0_88, %c0_89] : memref<128x8xf32, #tpu.memory_space<vmem>>, vector<128x8xf32>
    %cst_90 = arith.constant dense<0.000000e+00> : vector<2x8xf32>
    %298 = tpu.matmul %296, %297, %cst_90 {dimension_numbers = #tpu.dot_dimension_numbers<[1], [0], [0], [1], [0, 0, 1, 1], [], []>} : vector<2x128xf32>, vector<128x8xf32>, vector<2x8xf32> -> vector<2x8xf32>
    %c0_91 = arith.constant 0 : index
    %c0_92 = arith.constant 0 : index
    %299 = vector.load %arg9[%c0_91, %c0_92] : memref<1x8xf32, #tpu.memory_space<vmem>>, vector<1x8xf32>
    %300 = vector.broadcast %299 : vector<1x8xf32> to vector<2x8xf32>
    %301 = arith.addf %298, %300 : vector<2x8xf32>
    %c0_93 = arith.constant 0 : index
    %c0_94 = arith.constant 0 : index
    %302 = vector.load %arg10[%c0_93, %c0_94] : memref<2x8xf32, #tpu.memory_space<vmem>>, vector<2x8xf32>
    tpu.vector_store %arg10[%c0_93, %c0_94], %301 {strides = array<i32>} : memref<2x8xf32, #tpu.memory_space<vmem>>, vector<2x8xf32>,
    return
  }
}

</mosaic_0001>

<llo_original>
// kernel: tpu_custom_call.1
$region0: #{tpu_custom_call.1}
  #allocation0 [shape = 'u32[]', space=smem, size = 0x4, offset = 0x4, fixed_abs, tag = 'smem constant byte address 0x4 - core index']
  #allocation1 [shape = 'u32[72,128]{1,0:T(1,128)}', space=vmem, size = 0x9000, scoped, tag = 'internal scratch']
  %s0 = inlined_call_operand.vmem [shape: f32[2,4], index: 0, kind: input, shape index: {}]
  %s1 = inlined_call_operand.hbm [shape: f32[4,1024], index: 1, kind: input, shape index: {}]
  %s2 = inlined_call_operand.vmem [shape: f32[1,1024], index: 2, kind: input, shape index: {}]
  %s3 = inlined_call_operand.vmem [shape: f32[4,32,32], index: 3, kind: input, shape index: {}]
  %s4 = inlined_call_operand.hbm [shape: f32[2,32,32], index: 4, kind: input, shape index: {}]
  %s5 = inlined_call_operand.vmem [shape: f32[1,32], index: 5, kind: input, shape index: {}]
  %s6 = inlined_call_operand.hbm [shape: f32[32,128], index: 6, kind: input, shape index: {}]
  %s7 = inlined_call_operand.vmem [shape: f32[1,128], index: 7, kind: input, shape index: {}]
  %s8 = inlined_call_operand.vmem [shape: f32[128,8], index: 8, kind: input, shape index: {}]
  %s9 = inlined_call_operand.vmem [shape: f32[1,8], index: 9, kind: input, shape index: {}]
  %s10 = inlined_call_operand.hbm [shape: f32[2,8], index: 10, kind: output, shape index: {}]
  %s11 = sld [smem:[#allocation0]]
  $region62: #{tpu_custom_call.1} parent=0
    _
  %s13 = ssub.s32 1, %s11
  %s14 = scalar_select 0, %s13, %s11
  $region1: #{tpu_custom_call.1} parent=0
    #allocation2 [shape = 'u8[16384]{0}', space=vmem, size = 0x4000, scoped, tag = 'input window, operand 1, single buffered']
    #allocation3 [shape = 's32[1]{0}', space=sflag, size = 0x4, scoped, tag = 'scoped memory for tpu_custom_call.1']
    #allocation4 [shape = 's32[1]{0}', space=sflag, size = 0x4, scoped, tag = 'scoped memory for tpu_custom_call.1']
    #allocation5 [shape = 'u8[32768]{0}', space=vmem, size = 0x8000, scoped, tag = 'input window, operand 4, single buffered']
    #allocation6 [shape = 's32[1]{0}', space=sflag, size = 0x4, scoped, tag = 'scoped memory for tpu_custom_call.1']
    #allocation7 [shape = 'u8[16384]{0}', space=vmem, size = 0x4000, scoped, tag = 'input window, operand 6, single buffered']
    #allocation8 [shape = 'u8[1024]{0}', space=vmem, size = 0x400, scoped, tag = 'output window, operand 0, single buffered']
    %15 = vsyncpa [#allocation3], 0
    %16 = vsyncpa [#allocation6], 0
    %17 = vsyncpa [#allocation4], 0
    // Predicated region
    $region2: #{tpu_custom_call.1} parent=1 // pred_check
      _
    $region3: #{tpu_custom_call.1} parent=1 // pred_check_branch
      %19 = sbr.rel (0) target = $region5
    $region4: #{tpu_custom_call.1} parent=1 // pred_region
      _
    $region5: #{tpu_custom_call.1} parent=1 // pred_fallthru
      _
    // Predicated region
    $region6: #{tpu_custom_call.1} parent=1 // pred_check
      _
    $region7: #{tpu_custom_call.1} parent=1 // pred_check_branch
      %21 = sbr.rel (0) target = $region9
    $region8: #{tpu_custom_call.1} parent=1 // pred_region
      %23 = vsyncadd [#allocation3], 0
      %s25 = sshll.u32 %s1, 4
      %s26 = int_to_ptr.hbm [resolvable:$true] %s25
      %s27 = sshll.u32 [#allocation2], 4
      %s28 = int_to_ptr.vmem [resolvable:$true] %s27
      %30 = dma.hbm_to_vmem [thread:$0]  %s26, 512, %s28, [#allocation3]
    $region9: #{tpu_custom_call.1} parent=1 // pred_fallthru
      _
    // Predicated region
    $region10: #{tpu_custom_call.1} parent=1 // pred_check
      _
    $region11: #{tpu_custom_call.1} parent=1 // pred_check_branch
      %32 = sbr.rel (0) target = $region13
    $region12: #{tpu_custom_call.1} parent=1 // pred_region
      _
    $region13: #{tpu_custom_call.1} parent=1 // pred_fallthru
      _
    // Predicated region
    $region14: #{tpu_custom_call.1} parent=1 // pred_check
      _
    $region15: #{tpu_custom_call.1} parent=1 // pred_check_branch
      %34 = sbr.rel (0) target = $region17
    $region16: #{tpu_custom_call.1} parent=1 // pred_region
      _
    $region17: #{tpu_custom_call.1} parent=1 // pred_fallthru
      _
    // Predicated region
    $region18: #{tpu_custom_call.1} parent=1 // pred_check
      _
    $region19: #{tpu_custom_call.1} parent=1 // pred_check_branch
      %36 = sbr.rel (0) target = $region21
    $region20: #{tpu_custom_call.1} parent=1 // pred_region
      %38 = vsyncadd [#allocation6], 0
      %s39 = sshll.u32 %s4, 4
      %s40 = int_to_ptr.hbm [resolvable:$true] %s39
      %s41 = sshll.u32 [#allocation5], 4
      %s42 = int_to_ptr.vmem [resolvable:$true] %s41
      %47 = dma.hbm_to_vmem [thread:$0]  %s40, 1024, %s42, [#allocation6], 128, 128, 8
    $region21: #{tpu_custom_call.1} parent=1 // pred_fallthru
      _
    // Predicated region
    $region22: #{tpu_custom_call.1} parent=1 // pred_check
      _
    $region23: #{tpu_custom_call.1} parent=1 // pred_check_branch
      %49 = sbr.rel (0) target = $region25
    $region24: #{tpu_custom_call.1} parent=1 // pred_region
      _
    $region25: #{tpu_custom_call.1} parent=1 // pred_fallthru
      _
    // Predicated region
    $region26: #{tpu_custom_call.1} parent=1 // pred_check
      _
    $region27: #{tpu_custom_call.1} parent=1 // pred_check_branch
      %51 = sbr.rel (0) target = $region29
    $region28: #{tpu_custom_call.1} parent=1 // pred_region
      %53 = vsyncadd [#allocation6], 0
      %s54 = sshll.u32 %s6, 4
      %s55 = int_to_ptr.hbm [resolvable:$true] %s54
      %s56 = sshll.u32 [#allocation7], 4
      %s57 = int_to_ptr.vmem [resolvable:$true] %s56
      %62 = dma.hbm_to_vmem [thread:$0]  %s55, 512, %s57, [#allocation6], 128, 128, 8
    $region29: #{tpu_custom_call.1} parent=1 // pred_fallthru
      _
    // Predicated region
    $region30: #{tpu_custom_call.1} parent=1 // pred_check
      _
    $region31: #{tpu_custom_call.1} parent=1 // pred_check_branch
      %64 = sbr.rel (0) target = $region33
    $region32: #{tpu_custom_call.1} parent=1 // pred_region
      _
    $region33: #{tpu_custom_call.1} parent=1 // pred_fallthru
      _
    // Predicated region
    $region34: #{tpu_custom_call.1} parent=1 // pred_check
      _
    $region35: #{tpu_custom_call.1} parent=1 // pred_check_branch
      %66 = sbr.rel (0) target = $region37
    $region36: #{tpu_custom_call.1} parent=1 // pred_region
      _
    $region37: #{tpu_custom_call.1} parent=1 // pred_fallthru
      _
    // Predicated region
    $region38: #{tpu_custom_call.1} parent=1 // pred_check
      _
    $region39: #{tpu_custom_call.1} parent=1 // pred_check_branch
      %68 = sbr.rel (0) target = $region41
    $region40: #{tpu_custom_call.1} parent=1 // pred_region
      _
    $region41: #{tpu_custom_call.1} parent=1 // pred_fallthru
      _
    // Predicated region
    $region42: #{tpu_custom_call.1} parent=1 // pred_check
      _
    $region43: #{tpu_custom_call.1} parent=1 // pred_check_branch
      %70 = sbr.rel (0) target = $region45
    $region44: #{tpu_custom_call.1} parent=1 // pred_region
      %72 = dma.done [#allocation3], 512
    $region45: #{tpu_custom_call.1} parent=1 // pred_fallthru
      _
    // Predicated region
    $region46: #{tpu_custom_call.1} parent=1 // pred_check
      _
    $region47: #{tpu_custom_call.1} parent=1 // pred_check_branch
      %74 = sbr.rel (0) target = $region49
    $region48: #{tpu_custom_call.1} parent=1 // pred_region
      %76 = dma.done [#allocation6], 1024
    $region49: #{tpu_custom_call.1} parent=1 // pred_fallthru
      _
    // Predicated region
    $region50: #{tpu_custom_call.1} parent=1 // pred_check
      _
    $region51: #{tpu_custom_call.1} parent=1 // pred_check_branch
      %78 = sbr.rel (0) target = $region53
    $region52: #{tpu_custom_call.1} parent=1 // pred_region
      %80 = dma.done [#allocation6], 512
    $region53: #{tpu_custom_call.1} parent=1 // pred_fallthru
      _
    %v81 = vld [vmem:[%s0] sm:$0x3]
    %v82 = vld [vmem:[#allocation2] sm:$0xff]
    %v83 = vld [vmem:[#allocation2 + $0x8] sm:$0xff]
    %v84 = vld [vmem:[#allocation2 + $0x10] sm:$0xff]
    %v85 = vld [vmem:[#allocation2 + $0x18] sm:$0xff]
    %v86 = vld [vmem:[%s2] sm:$0xff]
    %v88 = vperm.slane %v86, 0
    %v89 = vperm.slane %v86, 1
    %v90 = vperm.slane %v86, 2
    %v91 = vperm.slane %v86, 3
    %v92 = vperm.slane %v86, 4
    %v93 = vperm.slane %v86, 5
    %v94 = vperm.slane %v86, 6
    %v95 = vperm.slane %v86, 7
    %108 = vst [vmem:[#allocation1] ss:$2 sm:$0xff] %v82
    %s109 = scalar_lea.vmem [#allocation1], 16
    %110 = vst [vmem:[%s109] ss:$2 sm:$0xff] %v83
    %s111 = scalar_lea.vmem [#allocation1], 32
    %112 = vst [vmem:[%s111] ss:$2 sm:$0xff] %v84
    %s113 = scalar_lea.vmem [#allocation1], 48
    %114 = vst [vmem:[%s113] ss:$2 sm:$0xff] %v85
    %v115 = vld.sshfl [vmem:[#allocation1] sm:$0xff pattern:$0x75316420]
    %v116 = vld.sshfl [vmem:[#allocation1 + $0x8] sm:$0xff pattern:$0x75316420]
    %v117 = vld.sshfl [vmem:[#allocation1 + $0x10] sm:$0xff pattern:$0x75316420]
    %v118 = vld.sshfl [vmem:[#allocation1 + $0x18] sm:$0xff pattern:$0x75316420]
    %v119 = vld.sshfl [vmem:[#allocation1 + $0x20] sm:$0xff pattern:$0x75316420]
    %v120 = vld.sshfl [vmem:[#allocation1 + $0x28] sm:$0xff pattern:$0x75316420]
    %v121 = vld.sshfl [vmem:[#allocation1 + $0x30] sm:$0xff pattern:$0x75316420]
    %v122 = vld.sshfl [vmem:[#allocation1 + $0x38] sm:$0xff pattern:$0x75316420]
    %vm123 = vcmask 31744
    %v125 = vsel %vm123, %v81, 0
    %vm127 = vcmask 1043456
    %v128 = vsel %vm127, %v115, 0
    %v130 = vsel %vm127, %v116, 0
    %v132 = vsel %vm127, %v117, 0
    %v134 = vsel %vm127, %v118, 0
    %v136 = vsel %vm127, %v119, 0
    %v138 = vsel %vm127, %v120, 0
    %v140 = vsel %vm127, %v121, 0
    %v142 = vsel %vm127, %v122, 0
    %144 = vmatpush.msra.mxu0 0.0
    %145 = vmatpush.msra.mxu0 0.0
    %146 = vmatpush.msra.mxu0 0.0
    %147 = vmatpush.msra.mxu0 0.0
    %148 = vmatpush.msra.mxu0 0.0
    %149 = vmatpush.msra.mxu0 0.0
    %150 = vmatpush.msra.mxu0 0.0
    %151 = vmatpush.msra.mxu0 0.0
    %152 = vmatpush.msra.mxu0 0.0
    %153 = vmatpush.msra.mxu0 0.0
    %154 = vmatpush.msra.mxu0 0.0
    %155 = vmatpush.msra.mxu0 0.0
    %156 = vmatpush.msra.mxu0 0.0
    %157 = vmatpush.msra.mxu0 0.0
    %158 = vmatpush.msra.mxu0 0.0
    %159 = vmatpush.msra.mxu0 %v128
    %160 = vmatmul.f32.gmra.mxu0 %v125
    %v161 = vpop.f32.mrf.mxu0
    %v162 = vadd.f32 %v88, %v161
    %163 = vdwg.mxu0
    %164 = vmatpush.msra.mxu0 0.0
    %165 = vmatpush.msra.mxu0 0.0
    %166 = vmatpush.msra.mxu0 0.0
    %167 = vmatpush.msra.mxu0 0.0
    %168 = vmatpush.msra.mxu0 0.0
    %169 = vmatpush.msra.mxu0 0.0
    %170 = vmatpush.msra.mxu0 0.0
    %171 = vmatpush.msra.mxu0 0.0
    %172 = vmatpush.msra.mxu0 0.0
    %173 = vmatpush.msra.mxu0 0.0
    %174 = vmatpush.msra.mxu0 0.0
    %175 = vmatpush.msra.mxu0 0.0
    %176 = vmatpush.msra.mxu0 0.0
    %177 = vmatpush.msra.mxu0 0.0
    %178 = vmatpush.msra.mxu0 0.0
    %179 = vmatpush.msra.mxu0 %v130
    %180 = vmatmul.f32.gmra.mxu0 %v125
    %v181 = vpop.f32.mrf.mxu0
    %v182 = vadd.f32 %v89, %v181
    %183 = vdwg.mxu0
    %184 = vmatpush.msra.mxu0 0.0
    %185 = vmatpush.msra.mxu0 0.0
    %186 = vmatpush.msra.mxu0 0.0
    %187 = vmatpush.msra.mxu0 0.0
    %188 = vmatpush.msra.mxu0 0.0
    %189 = vmatpush.msra.mxu0 0.0
    %190 = vmatpush.msra.mxu0 0.0
    %191 = vmatpush.msra.mxu0 0.0
    %192 = vmatpush.msra.mxu0 0.0
    %193 = vmatpush.msra.mxu0 0.0
    %194 = vmatpush.msra.mxu0 0.0
    %195 = vmatpush.msra.mxu0 0.0
    %196 = vmatpush.msra.mxu0 0.0
    %197 = vmatpush.msra.mxu0 0.0
    %198 = vmatpush.msra.mxu0 0.0
    %199 = vmatpush.msra.mxu0 %v132
    %200 = vmatmul.f32.gmra.mxu0 %v125
    %v201 = vpop.f32.mrf.mxu0
    %v202 = vadd.f32 %v90, %v201
    %203 = vdwg.mxu0
    %204 = vmatpush.msra.mxu0 0.0
    %205 = vmatpush.msra.mxu0 0.0
    %206 = vmatpush.msra.mxu0 0.0
    %207 = vmatpush.msra.mxu0 0.0
    %208 = vmatpush.msra.mxu0 0.0
    %209 = vmatpush.msra.mxu0 0.0
    %210 = vmatpush.msra.mxu0 0.0
    %211 = vmatpush.msra.mxu0 0.0
    %212 = vmatpush.msra.mxu0 0.0
    %213 = vmatpush.msra.mxu0 0.0
    %214 = vmatpush.msra.mxu0 0.0
    %215 = vmatpush.msra.mxu0 0.0
    %216 = vmatpush.msra.mxu0 0.0
    %217 = vmatpush.msra.mxu0 0.0
    %218 = vmatpush.msra.mxu0 0.0
    %219 = vmatpush.msra.mxu0 %v134
    %220 = vmatmul.f32.gmra.mxu0 %v125
    %v221 = vpop.f32.mrf.mxu0
    %v222 = vadd.f32 %v91, %v221
    %223 = vdwg.mxu0
    %224 = vmatpush.msra.mxu0 0.0
    %225 = vmatpush.msra.mxu0 0.0
    %226 = vmatpush.msra.mxu0 0.0
    %227 = vmatpush.msra.mxu0 0.0
    %228 = vmatpush.msra.mxu0 0.0
    %229 = vmatpush.msra.mxu0 0.0
    %230 = vmatpush.msra.mxu0 0.0
    %231 = vmatpush.msra.mxu0 0.0
    %232 = vmatpush.msra.mxu0 0.0
    %233 = vmatpush.msra.mxu0 0.0
    %234 = vmatpush.msra.mxu0 0.0
    %235 = vmatpush.msra.mxu0 0.0
    %236 = vmatpush.msra.mxu0 0.0
    %237 = vmatpush.msra.mxu0 0.0
    %238 = vmatpush.msra.mxu0 0.0
    %239 = vmatpush.msra.mxu0 %v136
    %240 = vmatmul.f32.gmra.mxu0 %v125
    %v241 = vpop.f32.mrf.mxu0
    %v242 = vadd.f32 %v92, %v241
    %243 = vdwg.mxu0
    %244 = vmatpush.msra.mxu0 0.0
    %245 = vmatpush.msra.mxu0 0.0
    %246 = vmatpush.msra.mxu0 0.0
    %247 = vmatpush.msra.mxu0 0.0
    %248 = vmatpush.msra.mxu0 0.0
    %249 = vmatpush.msra.mxu0 0.0
    %250 = vmatpush.msra.mxu0 0.0
    %251 = vmatpush.msra.mxu0 0.0
    %252 = vmatpush.msra.mxu0 0.0
    %253 = vmatpush.msra.mxu0 0.0
    %254 = vmatpush.msra.mxu0 0.0
    %255 = vmatpush.msra.mxu0 0.0
    %256 = vmatpush.msra.mxu0 0.0
    %257 = vmatpush.msra.mxu0 0.0
    %258 = vmatpush.msra.mxu0 0.0
    %259 = vmatpush.msra.mxu0 %v138
    %260 = vmatmul.f32.gmra.mxu0 %v125
    %v261 = vpop.f32.mrf.mxu0
    %v262 = vadd.f32 %v93, %v261
    %263 = vdwg.mxu0
    %264 = vmatpush.msra.mxu0 0.0
    %265 = vmatpush.msra.mxu0 0.0
    %266 = vmatpush.msra.mxu0 0.0
    %267 = vmatpush.msra.mxu0 0.0
    %268 = vmatpush.msra.mxu0 0.0
    %269 = vmatpush.msra.mxu0 0.0
    %270 = vmatpush.msra.mxu0 0.0
    %271 = vmatpush.msra.mxu0 0.0
    %272 = vmatpush.msra.mxu0 0.0
    %273 = vmatpush.msra.mxu0 0.0
    %274 = vmatpush.msra.mxu0 0.0
    %275 = vmatpush.msra.mxu0 0.0
    %276 = vmatpush.msra.mxu0 0.0
    %277 = vmatpush.msra.mxu0 0.0
    %278 = vmatpush.msra.mxu0 0.0
    %279 = vmatpush.msra.mxu0 %v140
    %280 = vmatmul.f32.gmra.mxu0 %v125
    %v281 = vpop.f32.mrf.mxu0
    %v282 = vadd.f32 %v94, %v281
    %283 = vdwg.mxu0
    %284 = vmatpush.msra.mxu0 0.0
    %285 = vmatpush.msra.mxu0 0.0
    %286 = vmatpush.msra.mxu0 0.0
    %287 = vmatpush.msra.mxu0 0.0
    %288 = vmatpush.msra.mxu0 0.0
    %289 = vmatpush.msra.mxu0 0.0
    %290 = vmatpush.msra.mxu0 0.0
    %291 = vmatpush.msra.mxu0 0.0
    %292 = vmatpush.msra.mxu0 0.0
    %293 = vmatpush.msra.mxu0 0.0
    %294 = vmatpush.msra.mxu0 0.0
    %295 = vmatpush.msra.mxu0 0.0
    %296 = vmatpush.msra.mxu0 0.0
    %297 = vmatpush.msra.mxu0 0.0
    %298 = vmatpush.msra.mxu0 0.0
    %299 = vmatpush.msra.mxu0 %v142
    %300 = vmatmul.f32.gmra.mxu0 %v125
    %v301 = vpop.f32.mrf.mxu0
    %v302 = vadd.f32 %v95, %v301
    %303 = vdwg.mxu0
    %v304 = vld [vmem:[%s3] sm:$0xff]
    %v305 = vld [vmem:[%s3 + $0x8] sm:$0xff]
    %v306 = vld [vmem:[%s3 + $0x10] sm:$0xff]
    %v307 = vld [vmem:[%s3 + $0x18] sm:$0xff]
    %s308 = scalar_lea.vmem %s3, 32
    %v309 = vld [vmem:[%s308] sm:$0xff]
    %v310 = vld [vmem:[%s308 + $0x8] sm:$0xff]
    %v311 = vld [vmem:[%s308 + $0x10] sm:$0xff]
    %v312 = vld [vmem:[%s308 + $0x18] sm:$0xff]
    %s313 = scalar_lea.vmem %s3, 64
    %v314 = vld [vmem:[%s313] sm:$0xff]
    %v315 = vld [vmem:[%s313 + $0x8] sm:$0xff]
    %v316 = vld [vmem:[%s313 + $0x10] sm:$0xff]
    %v317 = vld [vmem:[%s313 + $0x18] sm:$0xff]
    %s318 = scalar_lea.vmem %s3, 96
    %v319 = vld [vmem:[%s318] sm:$0xff]
    %v320 = vld [vmem:[%s318 + $0x8] sm:$0xff]
    %v321 = vld [vmem:[%s318 + $0x10] sm:$0xff]
    %v322 = vld [vmem:[%s318 + $0x18] sm:$0xff]
    %vm323 = vcmask 261120
    %v325 = vsel %vm323, 0.0, 0
    %327 = vmatpush.msra.mxu0 0.0
    %328 = vmatpush.msra.mxu0 0.0
    %329 = vmatpush.msra.mxu0 0.0
    %330 = vmatpush.msra.mxu0 0.0
    %331 = vmatpush.msra.mxu0 0.0
    %332 = vmatpush.msra.mxu0 0.0
    %333 = vmatpush.msra.mxu0 0.0
    %334 = vmatpush.msra.mxu0 0.0
    %335 = vmatpush.msra.mxu0 0.0
    %336 = vmatpush.msra.mxu0 0.0
    %337 = vmatpush.msra.mxu0 0.0
    %338 = vmatpush.msra.mxu0 0.0
    %339 = vmatpush.msra.mxu0 %v307
    %340 = vmatpush.msra.mxu0 %v306
    %341 = vmatpush.msra.mxu0 %v305
    %342 = vmatpush.msra.mxu0 %v304
    %343 = vmatmul.f32.gmra.mxu0 %v325
    %v344 = vpop.f32.mrf.mxu0
    %v345 = vadd.f32 0.0, %v344
    %346 = vdwg.mxu0
    %v347 = vadd.f32 %v162, %v345
    %v348 = vxor.u32 %v347, 2147483648
    %v349 = vmul.f32 %v348, 1.442695
    %v350 = vpow.pop %v349
    %v351 = vadd.f32 %v350, 1.0
    %v352 = vrcp.pop %v351
    %v353 = vmul.f32 %v351, %v352
    %v354 = vsub.f32 1.0, %v353
    %v355 = vmul.f32 %v352, %v354
    %v356 = vadd.f32 %v352, %v355
    %vm357 = vweird.f32 %v351
    %vm358 = vweird.f32 %v352
    %vm359 = vmor %vm357, %vm358
    %v360 = vsel %vm359, %v352, %v356
    %v361 = vand.u32 2147483647, %v351
    %vm362 = vcmp.eq.f32.partialorder %v361, 8.507059e+37
    %v363 = vand.u32 %v351, 2147483648
    %v364 = vor.u32 1.1754944e-38, %v363
    %v365 = vsel %vm362, %v364, %v360
    %v366 = vmul.f32 1.0, %v365
    %367 = vmatpush.msra.mxu0 0.0
    %368 = vmatpush.msra.mxu0 0.0
    %369 = vmatpush.msra.mxu0 0.0
    %370 = vmatpush.msra.mxu0 0.0
    %371 = vmatpush.msra.mxu0 0.0
    %372 = vmatpush.msra.mxu0 0.0
    %373 = vmatpush.msra.mxu0 0.0
    %374 = vmatpush.msra.mxu0 0.0
    %375 = vmatpush.msra.mxu0 0.0
    %376 = vmatpush.msra.mxu0 0.0
    %377 = vmatpush.msra.mxu0 0.0
    %378 = vmatpush.msra.mxu0 0.0
    %379 = vmatpush.msra.mxu0 %v312
    %380 = vmatpush.msra.mxu0 %v311
    %381 = vmatpush.msra.mxu0 %v310
    %382 = vmatpush.msra.mxu0 %v309
    %383 = vmatmul.f32.gmra.mxu0 %v325
    %v384 = vpop.f32.mrf.mxu0
    %v385 = vadd.f32 0.0, %v384
    %386 = vdwg.mxu0
    %388 = vrot.lane.b32.xlu0 %v385, 32
    %v389 = vpop.permute.xlu0 %388
    %v391 = vadd.f32 %v162, %v389
    %v392 = vxor.u32 %v391, 2147483648
    %v393 = vmul.f32 %v392, 1.442695
    %v394 = vpow.pop %v393
    %v395 = vadd.f32 %v394, 1.0
    %v396 = vrcp.pop %v395
    %v397 = vmul.f32 %v395, %v396
    %v398 = vsub.f32 1.0, %v397
    %v399 = vmul.f32 %v396, %v398
    %v400 = vadd.f32 %v396, %v399
    %vm401 = vweird.f32 %v395
    %vm402 = vweird.f32 %v396
    %vm403 = vmor %vm401, %vm402
    %v404 = vsel %vm403, %v396, %v400
    %v405 = vand.u32 2147483647, %v395
    %vm406 = vcmp.eq.f32.partialorder %v405, 8.507059e+37
    %v407 = vand.u32 %v395, 2147483648
    %v408 = vor.u32 1.1754944e-38, %v407
    %v409 = vsel %vm406, %v408, %v404
    %v410 = vmul.f32 1.0, %v409
    %411 = vmatpush.msra.mxu0 0.0
    %412 = vmatpush.msra.mxu0 0.0
    %413 = vmatpush.msra.mxu0 0.0
    %414 = vmatpush.msra.mxu0 0.0
    %415 = vmatpush.msra.mxu0 0.0
    %416 = vmatpush.msra.mxu0 0.0
    %417 = vmatpush.msra.mxu0 0.0
    %418 = vmatpush.msra.mxu0 0.0
    %419 = vmatpush.msra.mxu0 0.0
    %420 = vmatpush.msra.mxu0 0.0
    %421 = vmatpush.msra.mxu0 0.0
    %422 = vmatpush.msra.mxu0 0.0
    %423 = vmatpush.msra.mxu0 %v317
    %424 = vmatpush.msra.mxu0 %v316
    %425 = vmatpush.msra.mxu0 %v315
    %426 = vmatpush.msra.mxu0 %v314
    %427 = vmatmul.f32.gmra.mxu0 %v325
    %v428 = vpop.f32.mrf.mxu0
    %v429 = vadd.f32 0.0, %v428
    %430 = vdwg.mxu0
    %432 = vrot.lane.b32.xlu0 %v429, 64
    %v433 = vpop.permute.xlu0 %432
    %v435 = vadd.f32 %v162, %v433
    %v436 = vtanh.pop %v435
    %437 = vmatpush.msra.mxu0 0.0
    %438 = vmatpush.msra.mxu0 0.0
    %439 = vmatpush.msra.mxu0 0.0
    %440 = vmatpush.msra.mxu0 0.0
    %441 = vmatpush.msra.mxu0 0.0
    %442 = vmatpush.msra.mxu0 0.0
    %443 = vmatpush.msra.mxu0 0.0
    %444 = vmatpush.msra.mxu0 0.0
    %445 = vmatpush.msra.mxu0 0.0
    %446 = vmatpush.msra.mxu0 0.0
    %447 = vmatpush.msra.mxu0 0.0
    %448 = vmatpush.msra.mxu0 0.0
    %449 = vmatpush.msra.mxu0 %v322
    %450 = vmatpush.msra.mxu0 %v321
    %451 = vmatpush.msra.mxu0 %v320
    %452 = vmatpush.msra.mxu0 %v319
    %453 = vmatmul.f32.gmra.mxu0 %v325
    %v454 = vpop.f32.mrf.mxu0
    %v455 = vadd.f32 0.0, %v454
    %456 = vdwg.mxu0
    %458 = vrot.lane.b32.xlu0 %v455, 96
    %v459 = vpop.permute.xlu0 %458
    %v461 = vadd.f32 %v162, %v459
    %v462 = vxor.u32 %v461, 2147483648
    %v463 = vmul.f32 %v462, 1.442695
    %v464 = vpow.pop %v463
    %v465 = vadd.f32 %v464, 1.0
    %v466 = vrcp.pop %v465
    %v467 = vmul.f32 %v465, %v466
    %v468 = vsub.f32 1.0, %v467
    %v469 = vmul.f32 %v466, %v468
    %v470 = vadd.f32 %v466, %v469
    %vm471 = vweird.f32 %v465
    %vm472 = vweird.f32 %v466
    %vm473 = vmor %vm471, %vm472
    %v474 = vsel %vm473, %v466, %v470
    %v475 = vand.u32 2147483647, %v465
    %vm476 = vcmp.eq.f32.partialorder %v475, 8.507059e+37
    %v477 = vand.u32 %v465, 2147483648
    %v478 = vor.u32 1.1754944e-38, %v477
    %v479 = vsel %vm476, %v478, %v474
    %v480 = vmul.f32 1.0, %v479
    %v481 = vmul.f32 %v410, 0.0
    %483 = vrot.lane.b32.xlu0 %v436, 64
    %v484 = vpop.permute.xlu0 %483
    %v486 = vmul.f32 %v366, %v484
    %488 = vrot.lane.b32.xlu0 %v486, 32
    %v489 = vpop.permute.xlu0 %488
    %v491 = vadd.f32 %v481, %v489
    %v492 = vtanh.pop %v491
    %494 = vrot.lane.b32.xlu0 %v492, 64
    %v495 = vpop.permute.xlu0 %494
    %v497 = vmul.f32 %v480, %v495
    %499 = vrot.lane.b32.xlu0 %v497, 32
    %v500 = vpop.permute.xlu0 %499
    %v501 = vsel %vm323, %v500, 0
    %503 = vmatpush.msra.mxu0 0.0
    %504 = vmatpush.msra.mxu0 0.0
    %505 = vmatpush.msra.mxu0 0.0
    %506 = vmatpush.msra.mxu0 0.0
    %507 = vmatpush.msra.mxu0 0.0
    %508 = vmatpush.msra.mxu0 0.0
    %509 = vmatpush.msra.mxu0 0.0
    %510 = vmatpush.msra.mxu0 0.0
    %511 = vmatpush.msra.mxu0 0.0
    %512 = vmatpush.msra.mxu0 0.0
    %513 = vmatpush.msra.mxu0 0.0
    %514 = vmatpush.msra.mxu0 0.0
    %515 = vmatpush.msra.mxu0 %v307
    %516 = vmatpush.msra.mxu0 %v306
    %517 = vmatpush.msra.mxu0 %v305
    %518 = vmatpush.msra.mxu0 %v304
    %519 = vmatmul.f32.gmra.mxu0 %v501
    %v520 = vpop.f32.mrf.mxu0
    %v521 = vadd.f32 0.0, %v520
    %522 = vdwg.mxu0
    %v523 = vadd.f32 %v182, %v521
    %v524 = vxor.u32 %v523, 2147483648
    %v525 = vmul.f32 %v524, 1.442695
    %v526 = vpow.pop %v525
    %v527 = vadd.f32 %v526, 1.0
    %v528 = vrcp.pop %v527
    %v529 = vmul.f32 %v527, %v528
    %v530 = vsub.f32 1.0, %v529
    %v531 = vmul.f32 %v528, %v530
    %v532 = vadd.f32 %v528, %v531
    %vm533 = vweird.f32 %v527
    %vm534 = vweird.f32 %v528
    %vm535 = vmor %vm533, %vm534
    %v536 = vsel %vm535, %v528, %v532
    %v537 = vand.u32 2147483647, %v527
    %vm538 = vcmp.eq.f32.partialorder %v537, 8.507059e+37
    %v539 = vand.u32 %v527, 2147483648
    %v540 = vor.u32 1.1754944e-38, %v539
    %v541 = vsel %vm538, %v540, %v536
    %v542 = vmul.f32 1.0, %v541
    %543 = vmatpush.msra.mxu0 0.0
    %544 = vmatpush.msra.mxu0 0.0
    %545 = vmatpush.msra.mxu0 0.0
    %546 = vmatpush.msra.mxu0 0.0
    %547 = vmatpush.msra.mxu0 0.0
    %548 = vmatpush.msra.mxu0 0.0
    %549 = vmatpush.msra.mxu0 0.0
    %550 = vmatpush.msra.mxu0 0.0
    %551 = vmatpush.msra.mxu0 0.0
    %552 = vmatpush.msra.mxu0 0.0
    %553 = vmatpush.msra.mxu0 0.0
    %554 = vmatpush.msra.mxu0 0.0
    %555 = vmatpush.msra.mxu0 %v312
    %556 = vmatpush.msra.mxu0 %v311
    %557 = vmatpush.msra.mxu0 %v310
    %558 = vmatpush.msra.mxu0 %v309
    %559 = vmatmul.f32.gmra.mxu0 %v501
    %v560 = vpop.f32.mrf.mxu0
    %v561 = vadd.f32 0.0, %v560
    %562 = vdwg.mxu0
    %564 = vrot.lane.b32.xlu0 %v561, 32
    %v565 = vpop.permute.xlu0 %564
    %v567 = vadd.f32 %v182, %v565
    %v568 = vxor.u32 %v567, 2147483648
    %v569 = vmul.f32 %v568, 1.442695
    %v570 = vpow.pop %v569
    %v571 = vadd.f32 %v570, 1.0
    %v572 = vrcp.pop %v571
    %v573 = vmul.f32 %v571, %v572
    %v574 = vsub.f32 1.0, %v573
    %v575 = vmul.f32 %v572, %v574
    %v576 = vadd.f32 %v572, %v575
    %vm577 = vweird.f32 %v571
    %vm578 = vweird.f32 %v572
    %vm579 = vmor %vm577, %vm578
    %v580 = vsel %vm579, %v572, %v576
    %v581 = vand.u32 2147483647, %v571
    %vm582 = vcmp.eq.f32.partialorder %v581, 8.507059e+37
    %v583 = vand.u32 %v571, 2147483648
    %v584 = vor.u32 1.1754944e-38, %v583
    %v585 = vsel %vm582, %v584, %v580
    %v586 = vmul.f32 1.0, %v585
    %587 = vmatpush.msra.mxu0 0.0
    %588 = vmatpush.msra.mxu0 0.0
    %589 = vmatpush.msra.mxu0 0.0
    %590 = vmatpush.msra.mxu0 0.0
    %591 = vmatpush.msra.mxu0 0.0
    %592 = vmatpush.msra.mxu0 0.0
    %593 = vmatpush.msra.mxu0 0.0
    %594 = vmatpush.msra.mxu0 0.0
    %595 = vmatpush.msra.mxu0 0.0
    %596 = vmatpush.msra.mxu0 0.0
    %597 = vmatpush.msra.mxu0 0.0
    %598 = vmatpush.msra.mxu0 0.0
    %599 = vmatpush.msra.mxu0 %v317
    %600 = vmatpush.msra.mxu0 %v316
    %601 = vmatpush.msra.mxu0 %v315
    %602 = vmatpush.msra.mxu0 %v314
    %603 = vmatmul.f32.gmra.mxu0 %v501
    %v604 = vpop.f32.mrf.mxu0
    %v605 = vadd.f32 0.0, %v604
    %606 = vdwg.mxu0
    %608 = vrot.lane.b32.xlu0 %v605, 64
    %v609 = vpop.permute.xlu0 %608
    %v611 = vadd.f32 %v182, %v609
    %v612 = vtanh.pop %v611
    %613 = vmatpush.msra.mxu0 0.0
    %614 = vmatpush.msra.mxu0 0.0
    %615 = vmatpush.msra.mxu0 0.0
    %616 = vmatpush.msra.mxu0 0.0
    %617 = vmatpush.msra.mxu0 0.0
    %618 = vmatpush.msra.mxu0 0.0
    %619 = vmatpush.msra.mxu0 0.0
    %620 = vmatpush.msra.mxu0 0.0
    %621 = vmatpush.msra.mxu0 0.0
    %622 = vmatpush.msra.mxu0 0.0
    %623 = vmatpush.msra.mxu0 0.0
    %624 = vmatpush.msra.mxu0 0.0
    %625 = vmatpush.msra.mxu0 %v322
    %626 = vmatpush.msra.mxu0 %v321
    %627 = vmatpush.msra.mxu0 %v320
    %628 = vmatpush.msra.mxu0 %v319
    %629 = vmatmul.f32.gmra.mxu0 %v501
    %v630 = vpop.f32.mrf.mxu0
    %v631 = vadd.f32 0.0, %v630
    %632 = vdwg.mxu0
    %634 = vrot.lane.b32.xlu0 %v631, 96
    %v635 = vpop.permute.xlu0 %634
    %v637 = vadd.f32 %v182, %v635
    %v638 = vxor.u32 %v637, 2147483648
    %v639 = vmul.f32 %v638, 1.442695
    %v640 = vpow.pop %v639
    %v641 = vadd.f32 %v640, 1.0
    %v642 = vrcp.pop %v641
    %v643 = vmul.f32 %v641, %v642
    %v644 = vsub.f32 1.0, %v643
    %v645 = vmul.f32 %v642, %v644
    %v646 = vadd.f32 %v642, %v645
    %vm647 = vweird.f32 %v641
    %vm648 = vweird.f32 %v642
    %vm649 = vmor %vm647, %vm648
    %v650 = vsel %vm649, %v642, %v646
    %v651 = vand.u32 2147483647, %v641
    %vm652 = vcmp.eq.f32.partialorder %v651, 8.507059e+37
    %v653 = vand.u32 %v641, 2147483648
    %v654 = vor.u32 1.1754944e-38, %v653
    %v655 = vsel %vm652, %v654, %v650
    %v656 = vmul.f32 1.0, %v655
    %v657 = vmul.f32 %v586, %v491
    %659 = vrot.lane.b32.xlu0 %v612, 64
    %v660 = vpop.permute.xlu0 %659
    %v662 = vmul.f32 %v542, %v660
    %664 = vrot.lane.b32.xlu0 %v662, 32
    %v665 = vpop.permute.xlu0 %664
    %v667 = vadd.f32 %v657, %v665
    %v668 = vtanh.pop %v667
    %670 = vrot.lane.b32.xlu0 %v668, 64
    %v671 = vpop.permute.xlu0 %670
    %v673 = vmul.f32 %v656, %v671
    %675 = vrot.lane.b32.xlu0 %v673, 32
    %v676 = vpop.permute.xlu0 %675
    %v677 = vsel %vm323, %v676, 0
    %679 = vmatpush.msra.mxu0 0.0
    %680 = vmatpush.msra.mxu0 0.0
    %681 = vmatpush.msra.mxu0 0.0
    %682 = vmatpush.msra.mxu0 0.0
    %683 = vmatpush.msra.mxu0 0.0
    %684 = vmatpush.msra.mxu0 0.0
    %685 = vmatpush.msra.mxu0 0.0
    %686 = vmatpush.msra.mxu0 0.0
    %687 = vmatpush.msra.mxu0 0.0
    %688 = vmatpush.msra.mxu0 0.0
    %689 = vmatpush.msra.mxu0 0.0
    %690 = vmatpush.msra.mxu0 0.0
    %691 = vmatpush.msra.mxu0 %v307
    %692 = vmatpush.msra.mxu0 %v306
    %693 = vmatpush.msra.mxu0 %v305
    %694 = vmatpush.msra.mxu0 %v304
    %695 = vmatmul.f32.gmra.mxu0 %v677
    %v696 = vpop.f32.mrf.mxu0
    %v697 = vadd.f32 0.0, %v696
    %698 = vdwg.mxu0
    %v699 = vadd.f32 %v202, %v697
    %v700 = vxor.u32 %v699, 2147483648
    %v701 = vmul.f32 %v700, 1.442695
    %v702 = vpow.pop %v701
    %v703 = vadd.f32 %v702, 1.0
    %v704 = vrcp.pop %v703
    %v705 = vmul.f32 %v703, %v704
    %v706 = vsub.f32 1.0, %v705
    %v707 = vmul.f32 %v704, %v706
    %v708 = vadd.f32 %v704, %v707
    %vm709 = vweird.f32 %v703
    %vm710 = vweird.f32 %v704
    %vm711 = vmor %vm709, %vm710
    %v712 = vsel %vm711, %v704, %v708
    %v713 = vand.u32 2147483647, %v703
    %vm714 = vcmp.eq.f32.partialorder %v713, 8.507059e+37
    %v715 = vand.u32 %v703, 2147483648
    %v716 = vor.u32 1.1754944e-38, %v715
    %v717 = vsel %vm714, %v716, %v712
    %v718 = vmul.f32 1.0, %v717
    %719 = vmatpush.msra.mxu0 0.0
    %720 = vmatpush.msra.mxu0 0.0
    %721 = vmatpush.msra.mxu0 0.0
    %722 = vmatpush.msra.mxu0 0.0
    %723 = vmatpush.msra.mxu0 0.0
    %724 = vmatpush.msra.mxu0 0.0
    %725 = vmatpush.msra.mxu0 0.0
    %726 = vmatpush.msra.mxu0 0.0
    %727 = vmatpush.msra.mxu0 0.0
    %728 = vmatpush.msra.mxu0 0.0
    %729 = vmatpush.msra.mxu0 0.0
    %730 = vmatpush.msra.mxu0 0.0
    %731 = vmatpush.msra.mxu0 %v312
    %732 = vmatpush.msra.mxu0 %v311
    %733 = vmatpush.msra.mxu0 %v310
    %734 = vmatpush.msra.mxu0 %v309
    %735 = vmatmul.f32.gmra.mxu0 %v677
    %v736 = vpop.f32.mrf.mxu0
    %v737 = vadd.f32 0.0, %v736
    %738 = vdwg.mxu0
    %740 = vrot.lane.b32.xlu0 %v737, 32
    %v741 = vpop.permute.xlu0 %740
    %v743 = vadd.f32 %v202, %v741
    %v744 = vxor.u32 %v743, 2147483648
    %v745 = vmul.f32 %v744, 1.442695
    %v746 = vpow.pop %v745
    %v747 = vadd.f32 %v746, 1.0
    %v748 = vrcp.pop %v747
    %v749 = vmul.f32 %v747, %v748
    %v750 = vsub.f32 1.0, %v749
    %v751 = vmul.f32 %v748, %v750
    %v752 = vadd.f32 %v748, %v751
    %vm753 = vweird.f32 %v747
    %vm754 = vweird.f32 %v748
    %vm755 = vmor %vm753, %vm754
    %v756 = vsel %vm755, %v748, %v752
    %v757 = vand.u32 2147483647, %v747
    %vm758 = vcmp.eq.f32.partialorder %v757, 8.507059e+37
    %v759 = vand.u32 %v747, 2147483648
    %v760 = vor.u32 1.1754944e-38, %v759
    %v761 = vsel %vm758, %v760, %v756
    %v762 = vmul.f32 1.0, %v761
    %763 = vmatpush.msra.mxu0 0.0
    %764 = vmatpush.msra.mxu0 0.0
    %765 = vmatpush.msra.mxu0 0.0
    %766 = vmatpush.msra.mxu0 0.0
    %767 = vmatpush.msra.mxu0 0.0
    %768 = vmatpush.msra.mxu0 0.0
    %769 = vmatpush.msra.mxu0 0.0
    %770 = vmatpush.msra.mxu0 0.0
    %771 = vmatpush.msra.mxu0 0.0
    %772 = vmatpush.msra.mxu0 0.0
    %773 = vmatpush.msra.mxu0 0.0
    %774 = vmatpush.msra.mxu0 0.0
    %775 = vmatpush.msra.mxu0 %v317
    %776 = vmatpush.msra.mxu0 %v316
    %777 = vmatpush.msra.mxu0 %v315
    %778 = vmatpush.msra.mxu0 %v314
    %779 = vmatmul.f32.gmra.mxu0 %v677
    %v780 = vpop.f32.mrf.mxu0
    %v781 = vadd.f32 0.0, %v780
    %782 = vdwg.mxu0
    %784 = vrot.lane.b32.xlu0 %v781, 64
    %v785 = vpop.permute.xlu0 %784
    %v787 = vadd.f32 %v202, %v785
    %v788 = vtanh.pop %v787
    %789 = vmatpush.msra.mxu0 0.0
    %790 = vmatpush.msra.mxu0 0.0
    %791 = vmatpush.msra.mxu0 0.0
    %792 = vmatpush.msra.mxu0 0.0
    %793 = vmatpush.msra.mxu0 0.0
    %794 = vmatpush.msra.mxu0 0.0
    %795 = vmatpush.msra.mxu0 0.0
    %796 = vmatpush.msra.mxu0 0.0
    %797 = vmatpush.msra.mxu0 0.0
    %798 = vmatpush.msra.mxu0 0.0
    %799 = vmatpush.msra.mxu0 0.0
    %800 = vmatpush.msra.mxu0 0.0
    %801 = vmatpush.msra.mxu0 %v322
    %802 = vmatpush.msra.mxu0 %v321
    %803 = vmatpush.msra.mxu0 %v320
    %804 = vmatpush.msra.mxu0 %v319
    %805 = vmatmul.f32.gmra.mxu0 %v677
    %v806 = vpop.f32.mrf.mxu0
    %v807 = vadd.f32 0.0, %v806
    %808 = vdwg.mxu0
    %810 = vrot.lane.b32.xlu0 %v807, 96
    %v811 = vpop.permute.xlu0 %810
    %v813 = vadd.f32 %v202, %v811
    %v814 = vxor.u32 %v813, 2147483648
    %v815 = vmul.f32 %v814, 1.442695
    %v816 = vpow.pop %v815
    %v817 = vadd.f32 %v816, 1.0
    %v818 = vrcp.pop %v817
    %v819 = vmul.f32 %v817, %v818
    %v820 = vsub.f32 1.0, %v819
    %v821 = vmul.f32 %v818, %v820
    %v822 = vadd.f32 %v818, %v821
    %vm823 = vweird.f32 %v817
    %vm824 = vweird.f32 %v818
    %vm825 = vmor %vm823, %vm824
    %v826 = vsel %vm825, %v818, %v822
    %v827 = vand.u32 2147483647, %v817
    %vm828 = vcmp.eq.f32.partialorder %v827, 8.507059e+37
    %v829 = vand.u32 %v817, 2147483648
    %v830 = vor.u32 1.1754944e-38, %v829
    %v831 = vsel %vm828, %v830, %v826
    %v832 = vmul.f32 1.0, %v831
    %v833 = vmul.f32 %v762, %v667
    %835 = vrot.lane.b32.xlu0 %v788, 64
    %v836 = vpop.permute.xlu0 %835
    %v838 = vmul.f32 %v718, %v836
    %840 = vrot.lane.b32.xlu0 %v838, 32
    %v841 = vpop.permute.xlu0 %840
    %v843 = vadd.f32 %v833, %v841
    %v844 = vtanh.pop %v843
    %846 = vrot.lane.b32.xlu0 %v844, 64
    %v847 = vpop.permute.xlu0 %846
    %v849 = vmul.f32 %v832, %v847
    %851 = vrot.lane.b32.xlu0 %v849, 32
    %v852 = vpop.permute.xlu0 %851
    %v853 = vsel %vm323, %v852, 0
    %855 = vmatpush.msra.mxu0 0.0
    %856 = vmatpush.msra.mxu0 0.0
    %857 = vmatpush.msra.mxu0 0.0
    %858 = vmatpush.msra.mxu0 0.0
    %859 = vmatpush.msra.mxu0 0.0
    %860 = vmatpush.msra.mxu0 0.0
    %861 = vmatpush.msra.mxu0 0.0
    %862 = vmatpush.msra.mxu0 0.0
    %863 = vmatpush.msra.mxu0 0.0
    %864 = vmatpush.msra.mxu0 0.0
    %865 = vmatpush.msra.mxu0 0.0
    %866 = vmatpush.msra.mxu0 0.0
    %867 = vmatpush.msra.mxu0 %v307
    %868 = vmatpush.msra.mxu0 %v306
    %869 = vmatpush.msra.mxu0 %v305
    %870 = vmatpush.msra.mxu0 %v304
    %871 = vmatmul.f32.gmra.mxu0 %v853
    %v872 = vpop.f32.mrf.mxu0
    %v873 = vadd.f32 0.0, %v872
    %874 = vdwg.mxu0
    %v875 = vadd.f32 %v222, %v873
    %v876 = vxor.u32 %v875, 2147483648
    %v877 = vmul.f32 %v876, 1.442695
    %v878 = vpow.pop %v877
    %v879 = vadd.f32 %v878, 1.0
    %v880 = vrcp.pop %v879
    %v881 = vmul.f32 %v879, %v880
    %v882 = vsub.f32 1.0, %v881
    %v883 = vmul.f32 %v880, %v882
    %v884 = vadd.f32 %v880, %v883
    %vm885 = vweird.f32 %v879
    %vm886 = vweird.f32 %v880
    %vm887 = vmor %vm885, %vm886
    %v888 = vsel %vm887, %v880, %v884
    %v889 = vand.u32 2147483647, %v879
    %vm890 = vcmp.eq.f32.partialorder %v889, 8.507059e+37
    %v891 = vand.u32 %v879, 2147483648
    %v892 = vor.u32 1.1754944e-38, %v891
    %v893 = vsel %vm890, %v892, %v888
    %v894 = vmul.f32 1.0, %v893
    %895 = vmatpush.msra.mxu0 0.0
    %896 = vmatpush.msra.mxu0 0.0
    %897 = vmatpush.msra.mxu0 0.0
    %898 = vmatpush.msra.mxu0 0.0
    %899 = vmatpush.msra.mxu0 0.0
    %900 = vmatpush.msra.mxu0 0.0
    %901 = vmatpush.msra.mxu0 0.0
    %902 = vmatpush.msra.mxu0 0.0
    %903 = vmatpush.msra.mxu0 0.0
    %904 = vmatpush.msra.mxu0 0.0
    %905 = vmatpush.msra.mxu0 0.0
    %906 = vmatpush.msra.mxu0 0.0
    %907 = vmatpush.msra.mxu0 %v312
    %908 = vmatpush.msra.mxu0 %v311
    %909 = vmatpush.msra.mxu0 %v310
    %910 = vmatpush.msra.mxu0 %v309
    %911 = vmatmul.f32.gmra.mxu0 %v853
    %v912 = vpop.f32.mrf.mxu0
    %v913 = vadd.f32 0.0, %v912
    %914 = vdwg.mxu0
    %916 = vrot.lane.b32.xlu0 %v913, 32
    %v917 = vpop.permute.xlu0 %916
    %v919 = vadd.f32 %v222, %v917
    %v920 = vxor.u32 %v919, 2147483648
    %v921 = vmul.f32 %v920, 1.442695
    %v922 = vpow.pop %v921
    %v923 = vadd.f32 %v922, 1.0
    %v924 = vrcp.pop %v923
    %v925 = vmul.f32 %v923, %v924
    %v926 = vsub.f32 1.0, %v925
    %v927 = vmul.f32 %v924, %v926
    %v928 = vadd.f32 %v924, %v927
    %vm929 = vweird.f32 %v923
    %vm930 = vweird.f32 %v924
    %vm931 = vmor %vm929, %vm930
    %v932 = vsel %vm931, %v924, %v928
    %v933 = vand.u32 2147483647, %v923
    %vm934 = vcmp.eq.f32.partialorder %v933, 8.507059e+37
    %v935 = vand.u32 %v923, 2147483648
    %v936 = vor.u32 1.1754944e-38, %v935
    %v937 = vsel %vm934, %v936, %v932
    %v938 = vmul.f32 1.0, %v937
    %939 = vmatpush.msra.mxu0 0.0
    %940 = vmatpush.msra.mxu0 0.0
    %941 = vmatpush.msra.mxu0 0.0
    %942 = vmatpush.msra.mxu0 0.0
    %943 = vmatpush.msra.mxu0 0.0
    %944 = vmatpush.msra.mxu0 0.0
    %945 = vmatpush.msra.mxu0 0.0
    %946 = vmatpush.msra.mxu0 0.0
    %947 = vmatpush.msra.mxu0 0.0
    %948 = vmatpush.msra.mxu0 0.0
    %949 = vmatpush.msra.mxu0 0.0
    %950 = vmatpush.msra.mxu0 0.0
    %951 = vmatpush.msra.mxu0 %v317
    %952 = vmatpush.msra.mxu0 %v316
    %953 = vmatpush.msra.mxu0 %v315
    %954 = vmatpush.msra.mxu0 %v314
    %955 = vmatmul.f32.gmra.mxu0 %v853
    %v956 = vpop.f32.mrf.mxu0
    %v957 = vadd.f32 0.0, %v956
    %958 = vdwg.mxu0
    %960 = vrot.lane.b32.xlu0 %v957, 64
    %v961 = vpop.permute.xlu0 %960
    %v963 = vadd.f32 %v222, %v961
    %v964 = vtanh.pop %v963
    %965 = vmatpush.msra.mxu0 0.0
    %966 = vmatpush.msra.mxu0 0.0
    %967 = vmatpush.msra.mxu0 0.0
    %968 = vmatpush.msra.mxu0 0.0
    %969 = vmatpush.msra.mxu0 0.0
    %970 = vmatpush.msra.mxu0 0.0
    %971 = vmatpush.msra.mxu0 0.0
    %972 = vmatpush.msra.mxu0 0.0
    %973 = vmatpush.msra.mxu0 0.0
    %974 = vmatpush.msra.mxu0 0.0
    %975 = vmatpush.msra.mxu0 0.0
    %976 = vmatpush.msra.mxu0 0.0
    %977 = vmatpush.msra.mxu0 %v322
    %978 = vmatpush.msra.mxu0 %v321
    %979 = vmatpush.msra.mxu0 %v320
    %980 = vmatpush.msra.mxu0 %v319
    %981 = vmatmul.f32.gmra.mxu0 %v853
    %v982 = vpop.f32.mrf.mxu0
    %v983 = vadd.f32 0.0, %v982
    %984 = vdwg.mxu0
    %986 = vrot.lane.b32.xlu0 %v983, 96
    %v987 = vpop.permute.xlu0 %986
    %v989 = vadd.f32 %v222, %v987
    %v990 = vxor.u32 %v989, 2147483648
    %v991 = vmul.f32 %v990, 1.442695
    %v992 = vpow.pop %v991
    %v993 = vadd.f32 %v992, 1.0
    %v994 = vrcp.pop %v993
    %v995 = vmul.f32 %v993, %v994
    %v996 = vsub.f32 1.0, %v995
    %v997 = vmul.f32 %v994, %v996
    %v998 = vadd.f32 %v994, %v997
    %vm999 = vweird.f32 %v993
    %vm1000 = vweird.f32 %v994
    %vm1001 = vmor %vm999, %vm1000
    %v1002 = vsel %vm1001, %v994, %v998
    %v1003 = vand.u32 2147483647, %v993
    %vm1004 = vcmp.eq.f32.partialorder %v1003, 8.507059e+37
    %v1005 = vand.u32 %v993, 2147483648
    %v1006 = vor.u32 1.1754944e-38, %v1005
    %v1007 = vsel %vm1004, %v1006, %v1002
    %v1008 = vmul.f32 1.0, %v1007
    %v1009 = vmul.f32 %v938, %v843
    %1011 = vrot.lane.b32.xlu0 %v964, 64
    %v1012 = vpop.permute.xlu0 %1011
    %v1014 = vmul.f32 %v894, %v1012
    %1016 = vrot.lane.b32.xlu0 %v1014, 32
    %v1017 = vpop.permute.xlu0 %1016
    %v1019 = vadd.f32 %v1009, %v1017
    %v1020 = vtanh.pop %v1019
    %1022 = vrot.lane.b32.xlu0 %v1020, 64
    %v1023 = vpop.permute.xlu0 %1022
    %v1025 = vmul.f32 %v1008, %v1023
    %1027 = vrot.lane.b32.xlu0 %v1025, 32
    %v1028 = vpop.permute.xlu0 %1027
    %v1029 = vsel %vm323, %v1028, 0
    %1031 = vmatpush.msra.mxu0 0.0
    %1032 = vmatpush.msra.mxu0 0.0
    %1033 = vmatpush.msra.mxu0 0.0
    %1034 = vmatpush.msra.mxu0 0.0
    %1035 = vmatpush.msra.mxu0 0.0
    %1036 = vmatpush.msra.mxu0 0.0
    %1037 = vmatpush.msra.mxu0 0.0
    %1038 = vmatpush.msra.mxu0 0.0
    %1039 = vmatpush.msra.mxu0 0.0
    %1040 = vmatpush.msra.mxu0 0.0
    %1041 = vmatpush.msra.mxu0 0.0
    %1042 = vmatpush.msra.mxu0 0.0
    %1043 = vmatpush.msra.mxu0 %v307
    %1044 = vmatpush.msra.mxu0 %v306
    %1045 = vmatpush.msra.mxu0 %v305
    %1046 = vmatpush.msra.mxu0 %v304
    %1047 = vmatmul.f32.gmra.mxu0 %v1029
    %v1048 = vpop.f32.mrf.mxu0
    %v1049 = vadd.f32 0.0, %v1048
    %1050 = vdwg.mxu0
    %v1051 = vadd.f32 %v242, %v1049
    %v1052 = vxor.u32 %v1051, 2147483648
    %v1053 = vmul.f32 %v1052, 1.442695
    %v1054 = vpow.pop %v1053
    %v1055 = vadd.f32 %v1054, 1.0
    %v1056 = vrcp.pop %v1055
    %v1057 = vmul.f32 %v1055, %v1056
    %v1058 = vsub.f32 1.0, %v1057
    %v1059 = vmul.f32 %v1056, %v1058
    %v1060 = vadd.f32 %v1056, %v1059
    %vm1061 = vweird.f32 %v1055
    %vm1062 = vweird.f32 %v1056
    %vm1063 = vmor %vm1061, %vm1062
    %v1064 = vsel %vm1063, %v1056, %v1060
    %v1065 = vand.u32 2147483647, %v1055
    %vm1066 = vcmp.eq.f32.partialorder %v1065, 8.507059e+37
    %v1067 = vand.u32 %v1055, 2147483648
    %v1068 = vor.u32 1.1754944e-38, %v1067
    %v1069 = vsel %vm1066, %v1068, %v1064
    %v1070 = vmul.f32 1.0, %v1069
    %1071 = vmatpush.msra.mxu0 0.0
    %1072 = vmatpush.msra.mxu0 0.0
    %1073 = vmatpush.msra.mxu0 0.0
    %1074 = vmatpush.msra.mxu0 0.0
    %1075 = vmatpush.msra.mxu0 0.0
    %1076 = vmatpush.msra.mxu0 0.0
    %1077 = vmatpush.msra.mxu0 0.0
    %1078 = vmatpush.msra.mxu0 0.0
    %1079 = vmatpush.msra.mxu0 0.0
    %1080 = vmatpush.msra.mxu0 0.0
    %1081 = vmatpush.msra.mxu0 0.0
    %1082 = vmatpush.msra.mxu0 0.0
    %1083 = vmatpush.msra.mxu0 %v312
    %1084 = vmatpush.msra.mxu0 %v311
    %1085 = vmatpush.msra.mxu0 %v310
    %1086 = vmatpush.msra.mxu0 %v309
    %1087 = vmatmul.f32.gmra.mxu0 %v1029
    %v1088 = vpop.f32.mrf.mxu0
    %v1089 = vadd.f32 0.0, %v1088
    %1090 = vdwg.mxu0
    %1092 = vrot.lane.b32.xlu0 %v1089, 32
    %v1093 = vpop.permute.xlu0 %1092
    %v1095 = vadd.f32 %v242, %v1093
    %v1096 = vxor.u32 %v1095, 2147483648
    %v1097 = vmul.f32 %v1096, 1.442695
    %v1098 = vpow.pop %v1097
    %v1099 = vadd.f32 %v1098, 1.0
    %v1100 = vrcp.pop %v1099
    %v1101 = vmul.f32 %v1099, %v1100
    %v1102 = vsub.f32 1.0, %v1101
    %v1103 = vmul.f32 %v1100, %v1102
    %v1104 = vadd.f32 %v1100, %v1103
    %vm1105 = vweird.f32 %v1099
    %vm1106 = vweird.f32 %v1100
    %vm1107 = vmor %vm1105, %vm1106
    %v1108 = vsel %vm1107, %v1100, %v1104
    %v1109 = vand.u32 2147483647, %v1099
    %vm1110 = vcmp.eq.f32.partialorder %v1109, 8.507059e+37
    %v1111 = vand.u32 %v1099, 2147483648
    %v1112 = vor.u32 1.1754944e-38, %v1111
    %v1113 = vsel %vm1110, %v1112, %v1108
    %v1114 = vmul.f32 1.0, %v1113
    %1115 = vmatpush.msra.mxu0 0.0
    %1116 = vmatpush.msra.mxu0 0.0
    %1117 = vmatpush.msra.mxu0 0.0
    %1118 = vmatpush.msra.mxu0 0.0
    %1119 = vmatpush.msra.mxu0 0.0
    %1120 = vmatpush.msra.mxu0 0.0
    %1121 = vmatpush.msra.mxu0 0.0
    %1122 = vmatpush.msra.mxu0 0.0
    %1123 = vmatpush.msra.mxu0 0.0
    %1124 = vmatpush.msra.mxu0 0.0
    %1125 = vmatpush.msra.mxu0 0.0
    %1126 = vmatpush.msra.mxu0 0.0
    %1127 = vmatpush.msra.mxu0 %v317
    %1128 = vmatpush.msra.mxu0 %v316
    %1129 = vmatpush.msra.mxu0 %v315
    %1130 = vmatpush.msra.mxu0 %v314
    %1131 = vmatmul.f32.gmra.mxu0 %v1029
    %v1132 = vpop.f32.mrf.mxu0
    %v1133 = vadd.f32 0.0, %v1132
    %1134 = vdwg.mxu0
    %1136 = vrot.lane.b32.xlu0 %v1133, 64
    %v1137 = vpop.permute.xlu0 %1136
    %v1139 = vadd.f32 %v242, %v1137
    %v1140 = vtanh.pop %v1139
    %1141 = vmatpush.msra.mxu0 0.0
    %1142 = vmatpush.msra.mxu0 0.0
    %1143 = vmatpush.msra.mxu0 0.0
    %1144 = vmatpush.msra.mxu0 0.0
    %1145 = vmatpush.msra.mxu0 0.0
    %1146 = vmatpush.msra.mxu0 0.0
    %1147 = vmatpush.msra.mxu0 0.0
    %1148 = vmatpush.msra.mxu0 0.0
    %1149 = vmatpush.msra.mxu0 0.0
    %1150 = vmatpush.msra.mxu0 0.0
    %1151 = vmatpush.msra.mxu0 0.0
    %1152 = vmatpush.msra.mxu0 0.0
    %1153 = vmatpush.msra.mxu0 %v322
    %1154 = vmatpush.msra.mxu0 %v321
    %1155 = vmatpush.msra.mxu0 %v320
    %1156 = vmatpush.msra.mxu0 %v319
    %1157 = vmatmul.f32.gmra.mxu0 %v1029
    %v1158 = vpop.f32.mrf.mxu0
    %v1159 = vadd.f32 0.0, %v1158
    %1160 = vdwg.mxu0
    %1162 = vrot.lane.b32.xlu0 %v1159, 96
    %v1163 = vpop.permute.xlu0 %1162
    %v1165 = vadd.f32 %v242, %v1163
    %v1166 = vxor.u32 %v1165, 2147483648
    %v1167 = vmul.f32 %v1166, 1.442695
    %v1168 = vpow.pop %v1167
    %v1169 = vadd.f32 %v1168, 1.0
    %v1170 = vrcp.pop %v1169
    %v1171 = vmul.f32 %v1169, %v1170
    %v1172 = vsub.f32 1.0, %v1171
    %v1173 = vmul.f32 %v1170, %v1172
    %v1174 = vadd.f32 %v1170, %v1173
    %vm1175 = vweird.f32 %v1169
    %vm1176 = vweird.f32 %v1170
    %vm1177 = vmor %vm1175, %vm1176
    %v1178 = vsel %vm1177, %v1170, %v1174
    %v1179 = vand.u32 2147483647, %v1169
    %vm1180 = vcmp.eq.f32.partialorder %v1179, 8.507059e+37
    %v1181 = vand.u32 %v1169, 2147483648
    %v1182 = vor.u32 1.1754944e-38, %v1181
    %v1183 = vsel %vm1180, %v1182, %v1178
    %v1184 = vmul.f32 1.0, %v1183
    %v1185 = vmul.f32 %v1114, %v1019
    %1187 = vrot.lane.b32.xlu0 %v1140, 64
    %v1188 = vpop.permute.xlu0 %1187
    %v1190 = vmul.f32 %v1070, %v1188
    %1192 = vrot.lane.b32.xlu0 %v1190, 32
    %v1193 = vpop.permute.xlu0 %1192
    %v1195 = vadd.f32 %v1185, %v1193
    %v1196 = vtanh.pop %v1195
    %1198 = vrot.lane.b32.xlu0 %v1196, 64
    %v1199 = vpop.permute.xlu0 %1198
    %v1201 = vmul.f32 %v1184, %v1199
    %1203 = vrot.lane.b32.xlu0 %v1201, 32
    %v1204 = vpop.permute.xlu0 %1203
    %v1205 = vsel %vm323, %v1204, 0
    %1207 = vmatpush.msra.mxu0 0.0
    %1208 = vmatpush.msra.mxu0 0.0
    %1209 = vmatpush.msra.mxu0 0.0
    %1210 = vmatpush.msra.mxu0 0.0
    %1211 = vmatpush.msra.mxu0 0.0
    %1212 = vmatpush.msra.mxu0 0.0
    %1213 = vmatpush.msra.mxu0 0.0
    %1214 = vmatpush.msra.mxu0 0.0
    %1215 = vmatpush.msra.mxu0 0.0
    %1216 = vmatpush.msra.mxu0 0.0
    %1217 = vmatpush.msra.mxu0 0.0
    %1218 = vmatpush.msra.mxu0 0.0
    %1219 = vmatpush.msra.mxu0 %v307
    %1220 = vmatpush.msra.mxu0 %v306
    %1221 = vmatpush.msra.mxu0 %v305
    %1222 = vmatpush.msra.mxu0 %v304
    %1223 = vmatmul.f32.gmra.mxu0 %v1205
    %v1224 = vpop.f32.mrf.mxu0
    %v1225 = vadd.f32 0.0, %v1224
    %1226 = vdwg.mxu0
    %v1227 = vadd.f32 %v262, %v1225
    %v1228 = vxor.u32 %v1227, 2147483648
    %v1229 = vmul.f32 %v1228, 1.442695
    %v1230 = vpow.pop %v1229
    %v1231 = vadd.f32 %v1230, 1.0
    %v1232 = vrcp.pop %v1231
    %v1233 = vmul.f32 %v1231, %v1232
    %v1234 = vsub.f32 1.0, %v1233
    %v1235 = vmul.f32 %v1232, %v1234
    %v1236 = vadd.f32 %v1232, %v1235
    %vm1237 = vweird.f32 %v1231
    %vm1238 = vweird.f32 %v1232
    %vm1239 = vmor %vm1237, %vm1238
    %v1240 = vsel %vm1239, %v1232, %v1236
    %v1241 = vand.u32 2147483647, %v1231
    %vm1242 = vcmp.eq.f32.partialorder %v1241, 8.507059e+37
    %v1243 = vand.u32 %v1231, 2147483648
    %v1244 = vor.u32 1.1754944e-38, %v1243
    %v1245 = vsel %vm1242, %v1244, %v1240
    %v1246 = vmul.f32 1.0, %v1245
    %1247 = vmatpush.msra.mxu0 0.0
    %1248 = vmatpush.msra.mxu0 0.0
    %1249 = vmatpush.msra.mxu0 0.0
    %1250 = vmatpush.msra.mxu0 0.0
    %1251 = vmatpush.msra.mxu0 0.0
    %1252 = vmatpush.msra.mxu0 0.0
    %1253 = vmatpush.msra.mxu0 0.0
    %1254 = vmatpush.msra.mxu0 0.0
    %1255 = vmatpush.msra.mxu0 0.0
    %1256 = vmatpush.msra.mxu0 0.0
    %1257 = vmatpush.msra.mxu0 0.0
    %1258 = vmatpush.msra.mxu0 0.0
    %1259 = vmatpush.msra.mxu0 %v312
    %1260 = vmatpush.msra.mxu0 %v311
    %1261 = vmatpush.msra.mxu0 %v310
    %1262 = vmatpush.msra.mxu0 %v309
    %1263 = vmatmul.f32.gmra.mxu0 %v1205
    %v1264 = vpop.f32.mrf.mxu0
    %v1265 = vadd.f32 0.0, %v1264
    %1266 = vdwg.mxu0
    %1268 = vrot.lane.b32.xlu0 %v1265, 32
    %v1269 = vpop.permute.xlu0 %1268
    %v1271 = vadd.f32 %v262, %v1269
    %v1272 = vxor.u32 %v1271, 2147483648
    %v1273 = vmul.f32 %v1272, 1.442695
    %v1274 = vpow.pop %v1273
    %v1275 = vadd.f32 %v1274, 1.0
    %v1276 = vrcp.pop %v1275
    %v1277 = vmul.f32 %v1275, %v1276
    %v1278 = vsub.f32 1.0, %v1277
    %v1279 = vmul.f32 %v1276, %v1278
    %v1280 = vadd.f32 %v1276, %v1279
    %vm1281 = vweird.f32 %v1275
    %vm1282 = vweird.f32 %v1276
    %vm1283 = vmor %vm1281, %vm1282
    %v1284 = vsel %vm1283, %v1276, %v1280
    %v1285 = vand.u32 2147483647, %v1275
    %vm1286 = vcmp.eq.f32.partialorder %v1285, 8.507059e+37
    %v1287 = vand.u32 %v1275, 2147483648
    %v1288 = vor.u32 1.1754944e-38, %v1287
    %v1289 = vsel %vm1286, %v1288, %v1284
    %v1290 = vmul.f32 1.0, %v1289
    %1291 = vmatpush.msra.mxu0 0.0
    %1292 = vmatpush.msra.mxu0 0.0
    %1293 = vmatpush.msra.mxu0 0.0
    %1294 = vmatpush.msra.mxu0 0.0
    %1295 = vmatpush.msra.mxu0 0.0
    %1296 = vmatpush.msra.mxu0 0.0
    %1297 = vmatpush.msra.mxu0 0.0
    %1298 = vmatpush.msra.mxu0 0.0
    %1299 = vmatpush.msra.mxu0 0.0
    %1300 = vmatpush.msra.mxu0 0.0
    %1301 = vmatpush.msra.mxu0 0.0
    %1302 = vmatpush.msra.mxu0 0.0
    %1303 = vmatpush.msra.mxu0 %v317
    %1304 = vmatpush.msra.mxu0 %v316
    %1305 = vmatpush.msra.mxu0 %v315
    %1306 = vmatpush.msra.mxu0 %v314
    %1307 = vmatmul.f32.gmra.mxu0 %v1205
    %v1308 = vpop.f32.mrf.mxu0
    %v1309 = vadd.f32 0.0, %v1308
    %1310 = vdwg.mxu0
    %1312 = vrot.lane.b32.xlu0 %v1309, 64
    %v1313 = vpop.permute.xlu0 %1312
    %v1315 = vadd.f32 %v262, %v1313
    %v1316 = vtanh.pop %v1315
    %1317 = vmatpush.msra.mxu0 0.0
    %1318 = vmatpush.msra.mxu0 0.0
    %1319 = vmatpush.msra.mxu0 0.0
    %1320 = vmatpush.msra.mxu0 0.0
    %1321 = vmatpush.msra.mxu0 0.0
    %1322 = vmatpush.msra.mxu0 0.0
    %1323 = vmatpush.msra.mxu0 0.0
    %1324 = vmatpush.msra.mxu0 0.0
    %1325 = vmatpush.msra.mxu0 0.0
    %1326 = vmatpush.msra.mxu0 0.0
    %1327 = vmatpush.msra.mxu0 0.0
    %1328 = vmatpush.msra.mxu0 0.0
    %1329 = vmatpush.msra.mxu0 %v322
    %1330 = vmatpush.msra.mxu0 %v321
    %1331 = vmatpush.msra.mxu0 %v320
    %1332 = vmatpush.msra.mxu0 %v319
    %1333 = vmatmul.f32.gmra.mxu0 %v1205
    %v1334 = vpop.f32.mrf.mxu0
    %v1335 = vadd.f32 0.0, %v1334
    %1336 = vdwg.mxu0
    %1338 = vrot.lane.b32.xlu0 %v1335, 96
    %v1339 = vpop.permute.xlu0 %1338
    %v1341 = vadd.f32 %v262, %v1339
    %v1342 = vxor.u32 %v1341, 2147483648
    %v1343 = vmul.f32 %v1342, 1.442695
    %v1344 = vpow.pop %v1343
    %v1345 = vadd.f32 %v1344, 1.0
    %v1346 = vrcp.pop %v1345
    %v1347 = vmul.f32 %v1345, %v1346
    %v1348 = vsub.f32 1.0, %v1347
    %v1349 = vmul.f32 %v1346, %v1348
    %v1350 = vadd.f32 %v1346, %v1349
    %vm1351 = vweird.f32 %v1345
    %vm1352 = vweird.f32 %v1346
    %vm1353 = vmor %vm1351, %vm1352
    %v1354 = vsel %vm1353, %v1346, %v1350
    %v1355 = vand.u32 2147483647, %v1345
    %vm1356 = vcmp.eq.f32.partialorder %v1355, 8.507059e+37
    %v1357 = vand.u32 %v1345, 2147483648
    %v1358 = vor.u32 1.1754944e-38, %v1357
    %v1359 = vsel %vm1356, %v1358, %v1354
    %v1360 = vmul.f32 1.0, %v1359
    %v1361 = vmul.f32 %v1290, %v1195
    %1363 = vrot.lane.b32.xlu0 %v1316, 64
    %v1364 = vpop.permute.xlu0 %1363
    %v1366 = vmul.f32 %v1246, %v1364
    %1368 = vrot.lane.b32.xlu0 %v1366, 32
    %v1369 = vpop.permute.xlu0 %1368
    %v1371 = vadd.f32 %v1361, %v1369
    %v1372 = vtanh.pop %v1371
    %1374 = vrot.lane.b32.xlu0 %v1372, 64
    %v1375 = vpop.permute.xlu0 %1374
    %v1377 = vmul.f32 %v1360, %v1375
    %1379 = vrot.lane.b32.xlu0 %v1377, 32
    %v1380 = vpop.permute.xlu0 %1379
    %v1381 = vsel %vm323, %v1380, 0
    %1383 = vmatpush.msra.mxu0 0.0
    %1384 = vmatpush.msra.mxu0 0.0
    %1385 = vmatpush.msra.mxu0 0.0
    %1386 = vmatpush.msra.mxu0 0.0
    %1387 = vmatpush.msra.mxu0 0.0
    %1388 = vmatpush.msra.mxu0 0.0
    %1389 = vmatpush.msra.mxu0 0.0
    %1390 = vmatpush.msra.mxu0 0.0
    %1391 = vmatpush.msra.mxu0 0.0
    %1392 = vmatpush.msra.mxu0 0.0
    %1393 = vmatpush.msra.mxu0 0.0
    %1394 = vmatpush.msra.mxu0 0.0
    %1395 = vmatpush.msra.mxu0 %v307
    %1396 = vmatpush.msra.mxu0 %v306
    %1397 = vmatpush.msra.mxu0 %v305
    %1398 = vmatpush.msra.mxu0 %v304
    %1399 = vmatmul.f32.gmra.mxu0 %v1381
    %v1400 = vpop.f32.mrf.mxu0
    %v1401 = vadd.f32 0.0, %v1400
    %1402 = vdwg.mxu0
    %v1403 = vadd.f32 %v282, %v1401
    %v1404 = vxor.u32 %v1403, 2147483648
    %v1405 = vmul.f32 %v1404, 1.442695
    %v1406 = vpow.pop %v1405
    %v1407 = vadd.f32 %v1406, 1.0
    %v1408 = vrcp.pop %v1407
    %v1409 = vmul.f32 %v1407, %v1408
    %v1410 = vsub.f32 1.0, %v1409
    %v1411 = vmul.f32 %v1408, %v1410
    %v1412 = vadd.f32 %v1408, %v1411
    %vm1413 = vweird.f32 %v1407
    %vm1414 = vweird.f32 %v1408
    %vm1415 = vmor %vm1413, %vm1414
    %v1416 = vsel %vm1415, %v1408, %v1412
    %v1417 = vand.u32 2147483647, %v1407
    %vm1418 = vcmp.eq.f32.partialorder %v1417, 8.507059e+37
    %v1419 = vand.u32 %v1407, 2147483648
    %v1420 = vor.u32 1.1754944e-38, %v1419
    %v1421 = vsel %vm1418, %v1420, %v1416
    %v1422 = vmul.f32 1.0, %v1421
    %1423 = vmatpush.msra.mxu0 0.0
    %1424 = vmatpush.msra.mxu0 0.0
    %1425 = vmatpush.msra.mxu0 0.0
    %1426 = vmatpush.msra.mxu0 0.0
    %1427 = vmatpush.msra.mxu0 0.0
    %1428 = vmatpush.msra.mxu0 0.0
    %1429 = vmatpush.msra.mxu0 0.0
    %1430 = vmatpush.msra.mxu0 0.0
    %1431 = vmatpush.msra.mxu0 0.0
    %1432 = vmatpush.msra.mxu0 0.0
    %1433 = vmatpush.msra.mxu0 0.0
    %1434 = vmatpush.msra.mxu0 0.0
    %1435 = vmatpush.msra.mxu0 %v312
    %1436 = vmatpush.msra.mxu0 %v311
    %1437 = vmatpush.msra.mxu0 %v310
    %1438 = vmatpush.msra.mxu0 %v309
    %1439 = vmatmul.f32.gmra.mxu0 %v1381
    %v1440 = vpop.f32.mrf.mxu0
    %v1441 = vadd.f32 0.0, %v1440
    %1442 = vdwg.mxu0
    %1444 = vrot.lane.b32.xlu0 %v1441, 32
    %v1445 = vpop.permute.xlu0 %1444
    %v1447 = vadd.f32 %v282, %v1445
    %v1448 = vxor.u32 %v1447, 2147483648
    %v1449 = vmul.f32 %v1448, 1.442695
    %v1450 = vpow.pop %v1449
    %v1451 = vadd.f32 %v1450, 1.0
    %v1452 = vrcp.pop %v1451
    %v1453 = vmul.f32 %v1451, %v1452
    %v1454 = vsub.f32 1.0, %v1453
    %v1455 = vmul.f32 %v1452, %v1454
    %v1456 = vadd.f32 %v1452, %v1455
    %vm1457 = vweird.f32 %v1451
    %vm1458 = vweird.f32 %v1452
    %vm1459 = vmor %vm1457, %vm1458
    %v1460 = vsel %vm1459, %v1452, %v1456
    %v1461 = vand.u32 2147483647, %v1451
    %vm1462 = vcmp.eq.f32.partialorder %v1461, 8.507059e+37
    %v1463 = vand.u32 %v1451, 2147483648
    %v1464 = vor.u32 1.1754944e-38, %v1463
    %v1465 = vsel %vm1462, %v1464, %v1460
    %v1466 = vmul.f32 1.0, %v1465
    %1467 = vmatpush.msra.mxu0 0.0
    %1468 = vmatpush.msra.mxu0 0.0
    %1469 = vmatpush.msra.mxu0 0.0
    %1470 = vmatpush.msra.mxu0 0.0
    %1471 = vmatpush.msra.mxu0 0.0
    %1472 = vmatpush.msra.mxu0 0.0
    %1473 = vmatpush.msra.mxu0 0.0
    %1474 = vmatpush.msra.mxu0 0.0
    %1475 = vmatpush.msra.mxu0 0.0
    %1476 = vmatpush.msra.mxu0 0.0
    %1477 = vmatpush.msra.mxu0 0.0
    %1478 = vmatpush.msra.mxu0 0.0
    %1479 = vmatpush.msra.mxu0 %v317
    %1480 = vmatpush.msra.mxu0 %v316
    %1481 = vmatpush.msra.mxu0 %v315
    %1482 = vmatpush.msra.mxu0 %v314
    %1483 = vmatmul.f32.gmra.mxu0 %v1381
    %v1484 = vpop.f32.mrf.mxu0
    %v1485 = vadd.f32 0.0, %v1484
    %1486 = vdwg.mxu0
    %1488 = vrot.lane.b32.xlu0 %v1485, 64
    %v1489 = vpop.permute.xlu0 %1488
    %v1491 = vadd.f32 %v282, %v1489
    %v1492 = vtanh.pop %v1491
    %1493 = vmatpush.msra.mxu0 0.0
    %1494 = vmatpush.msra.mxu0 0.0
    %1495 = vmatpush.msra.mxu0 0.0
    %1496 = vmatpush.msra.mxu0 0.0
    %1497 = vmatpush.msra.mxu0 0.0
    %1498 = vmatpush.msra.mxu0 0.0
    %1499 = vmatpush.msra.mxu0 0.0
    %1500 = vmatpush.msra.mxu0 0.0
    %1501 = vmatpush.msra.mxu0 0.0
    %1502 = vmatpush.msra.mxu0 0.0
    %1503 = vmatpush.msra.mxu0 0.0
    %1504 = vmatpush.msra.mxu0 0.0
    %1505 = vmatpush.msra.mxu0 %v322
    %1506 = vmatpush.msra.mxu0 %v321
    %1507 = vmatpush.msra.mxu0 %v320
    %1508 = vmatpush.msra.mxu0 %v319
    %1509 = vmatmul.f32.gmra.mxu0 %v1381
    %v1510 = vpop.f32.mrf.mxu0
    %v1511 = vadd.f32 0.0, %v1510
    %1512 = vdwg.mxu0
    %1514 = vrot.lane.b32.xlu0 %v1511, 96
    %v1515 = vpop.permute.xlu0 %1514
    %v1517 = vadd.f32 %v282, %v1515
    %v1518 = vxor.u32 %v1517, 2147483648
    %v1519 = vmul.f32 %v1518, 1.442695
    %v1520 = vpow.pop %v1519
    %v1521 = vadd.f32 %v1520, 1.0
    %v1522 = vrcp.pop %v1521
    %v1523 = vmul.f32 %v1521, %v1522
    %v1524 = vsub.f32 1.0, %v1523
    %v1525 = vmul.f32 %v1522, %v1524
    %v1526 = vadd.f32 %v1522, %v1525
    %vm1527 = vweird.f32 %v1521
    %vm1528 = vweird.f32 %v1522
    %vm1529 = vmor %vm1527, %vm1528
    %v1530 = vsel %vm1529, %v1522, %v1526
    %v1531 = vand.u32 2147483647, %v1521
    %vm1532 = vcmp.eq.f32.partialorder %v1531, 8.507059e+37
    %v1533 = vand.u32 %v1521, 2147483648
    %v1534 = vor.u32 1.1754944e-38, %v1533
    %v1535 = vsel %vm1532, %v1534, %v1530
    %v1536 = vmul.f32 1.0, %v1535
    %v1537 = vmul.f32 %v1466, %v1371
    %1539 = vrot.lane.b32.xlu0 %v1492, 64
    %v1540 = vpop.permute.xlu0 %1539
    %v1542 = vmul.f32 %v1422, %v1540
    %1544 = vrot.lane.b32.xlu0 %v1542, 32
    %v1545 = vpop.permute.xlu0 %1544
    %v1547 = vadd.f32 %v1537, %v1545
    %v1548 = vtanh.pop %v1547
    %1550 = vrot.lane.b32.xlu0 %v1548, 64
    %v1551 = vpop.permute.xlu0 %1550
    %v1553 = vmul.f32 %v1536, %v1551
    %1555 = vrot.lane.b32.xlu0 %v1553, 32
    %v1556 = vpop.permute.xlu0 %1555
    %v1557 = vsel %vm323, %v1556, 0
    %1559 = vmatpush.msra.mxu0 0.0
    %1560 = vmatpush.msra.mxu0 0.0
    %1561 = vmatpush.msra.mxu0 0.0
    %1562 = vmatpush.msra.mxu0 0.0
    %1563 = vmatpush.msra.mxu0 0.0
    %1564 = vmatpush.msra.mxu0 0.0
    %1565 = vmatpush.msra.mxu0 0.0
    %1566 = vmatpush.msra.mxu0 0.0
    %1567 = vmatpush.msra.mxu0 0.0
    %1568 = vmatpush.msra.mxu0 0.0
    %1569 = vmatpush.msra.mxu0 0.0
    %1570 = vmatpush.msra.mxu0 0.0
    %1571 = vmatpush.msra.mxu0 %v307
    %1572 = vmatpush.msra.mxu0 %v306
    %1573 = vmatpush.msra.mxu0 %v305
    %1574 = vmatpush.msra.mxu0 %v304
    %1575 = vmatmul.f32.gmra.mxu0 %v1557
    %v1576 = vpop.f32.mrf.mxu0
    %v1577 = vadd.f32 0.0, %v1576
    %1578 = vdwg.mxu0
    %v1579 = vadd.f32 %v302, %v1577
    %v1580 = vxor.u32 %v1579, 2147483648
    %v1581 = vmul.f32 %v1580, 1.442695
    %v1582 = vpow.pop %v1581
    %v1583 = vadd.f32 %v1582, 1.0
    %v1584 = vrcp.pop %v1583
    %v1585 = vmul.f32 %v1583, %v1584
    %v1586 = vsub.f32 1.0, %v1585
    %v1587 = vmul.f32 %v1584, %v1586
    %v1588 = vadd.f32 %v1584, %v1587
    %vm1589 = vweird.f32 %v1583
    %vm1590 = vweird.f32 %v1584
    %vm1591 = vmor %vm1589, %vm1590
    %v1592 = vsel %vm1591, %v1584, %v1588
    %v1593 = vand.u32 2147483647, %v1583
    %vm1594 = vcmp.eq.f32.partialorder %v1593, 8.507059e+37
    %v1595 = vand.u32 %v1583, 2147483648
    %v1596 = vor.u32 1.1754944e-38, %v1595
    %v1597 = vsel %vm1594, %v1596, %v1592
    %v1598 = vmul.f32 1.0, %v1597
    %1599 = vmatpush.msra.mxu0 0.0
    %1600 = vmatpush.msra.mxu0 0.0
    %1601 = vmatpush.msra.mxu0 0.0
    %1602 = vmatpush.msra.mxu0 0.0
    %1603 = vmatpush.msra.mxu0 0.0
    %1604 = vmatpush.msra.mxu0 0.0
    %1605 = vmatpush.msra.mxu0 0.0
    %1606 = vmatpush.msra.mxu0 0.0
    %1607 = vmatpush.msra.mxu0 0.0
    %1608 = vmatpush.msra.mxu0 0.0
    %1609 = vmatpush.msra.mxu0 0.0
    %1610 = vmatpush.msra.mxu0 0.0
    %1611 = vmatpush.msra.mxu0 %v312
    %1612 = vmatpush.msra.mxu0 %v311
    %1613 = vmatpush.msra.mxu0 %v310
    %1614 = vmatpush.msra.mxu0 %v309
    %1615 = vmatmul.f32.gmra.mxu0 %v1557
    %v1616 = vpop.f32.mrf.mxu0
    %v1617 = vadd.f32 0.0, %v1616
    %1618 = vdwg.mxu0
    %1620 = vrot.lane.b32.xlu0 %v1617, 32
    %v1621 = vpop.permute.xlu0 %1620
    %v1623 = vadd.f32 %v302, %v1621
    %v1624 = vxor.u32 %v1623, 2147483648
    %v1625 = vmul.f32 %v1624, 1.442695
    %v1626 = vpow.pop %v1625
    %v1627 = vadd.f32 %v1626, 1.0
    %v1628 = vrcp.pop %v1627
    %v1629 = vmul.f32 %v1627, %v1628
    %v1630 = vsub.f32 1.0, %v1629
    %v1631 = vmul.f32 %v1628, %v1630
    %v1632 = vadd.f32 %v1628, %v1631
    %vm1633 = vweird.f32 %v1627
    %vm1634 = vweird.f32 %v1628
    %vm1635 = vmor %vm1633, %vm1634
    %v1636 = vsel %vm1635, %v1628, %v1632
    %v1637 = vand.u32 2147483647, %v1627
    %vm1638 = vcmp.eq.f32.partialorder %v1637, 8.507059e+37
    %v1639 = vand.u32 %v1627, 2147483648
    %v1640 = vor.u32 1.1754944e-38, %v1639
    %v1641 = vsel %vm1638, %v1640, %v1636
    %v1642 = vmul.f32 1.0, %v1641
    %1643 = vmatpush.msra.mxu0 0.0
    %1644 = vmatpush.msra.mxu0 0.0
    %1645 = vmatpush.msra.mxu0 0.0
    %1646 = vmatpush.msra.mxu0 0.0
    %1647 = vmatpush.msra.mxu0 0.0
    %1648 = vmatpush.msra.mxu0 0.0
    %1649 = vmatpush.msra.mxu0 0.0
    %1650 = vmatpush.msra.mxu0 0.0
    %1651 = vmatpush.msra.mxu0 0.0
    %1652 = vmatpush.msra.mxu0 0.0
    %1653 = vmatpush.msra.mxu0 0.0
    %1654 = vmatpush.msra.mxu0 0.0
    %1655 = vmatpush.msra.mxu0 %v317
    %1656 = vmatpush.msra.mxu0 %v316
    %1657 = vmatpush.msra.mxu0 %v315
    %1658 = vmatpush.msra.mxu0 %v314
    %1659 = vmatmul.f32.gmra.mxu0 %v1557
    %v1660 = vpop.f32.mrf.mxu0
    %v1661 = vadd.f32 0.0, %v1660
    %1662 = vdwg.mxu0
    %1664 = vrot.lane.b32.xlu0 %v1661, 64
    %v1665 = vpop.permute.xlu0 %1664
    %v1667 = vadd.f32 %v302, %v1665
    %v1668 = vtanh.pop %v1667
    %1669 = vmatpush.msra.mxu0 0.0
    %1670 = vmatpush.msra.mxu0 0.0
    %1671 = vmatpush.msra.mxu0 0.0
    %1672 = vmatpush.msra.mxu0 0.0
    %1673 = vmatpush.msra.mxu0 0.0
    %1674 = vmatpush.msra.mxu0 0.0
    %1675 = vmatpush.msra.mxu0 0.0
    %1676 = vmatpush.msra.mxu0 0.0
    %1677 = vmatpush.msra.mxu0 0.0
    %1678 = vmatpush.msra.mxu0 0.0
    %1679 = vmatpush.msra.mxu0 0.0
    %1680 = vmatpush.msra.mxu0 0.0
    %1681 = vmatpush.msra.mxu0 %v322
    %1682 = vmatpush.msra.mxu0 %v321
    %1683 = vmatpush.msra.mxu0 %v320
    %1684 = vmatpush.msra.mxu0 %v319
    %1685 = vmatmul.f32.gmra.mxu0 %v1557
    %v1686 = vpop.f32.mrf.mxu0
    %v1687 = vadd.f32 0.0, %v1686
    %1688 = vdwg.mxu0
    %1690 = vrot.lane.b32.xlu0 %v1687, 96
    %v1691 = vpop.permute.xlu0 %1690
    %v1693 = vadd.f32 %v302, %v1691
    %v1694 = vxor.u32 %v1693, 2147483648
    %v1695 = vmul.f32 %v1694, 1.442695
    %v1696 = vpow.pop %v1695
    %v1697 = vadd.f32 %v1696, 1.0
    %v1698 = vrcp.pop %v1697
    %v1699 = vmul.f32 %v1697, %v1698
    %v1700 = vsub.f32 1.0, %v1699
    %v1701 = vmul.f32 %v1698, %v1700
    %v1702 = vadd.f32 %v1698, %v1701
    %vm1703 = vweird.f32 %v1697
    %vm1704 = vweird.f32 %v1698
    %vm1705 = vmor %vm1703, %vm1704
    %v1706 = vsel %vm1705, %v1698, %v1702
    %v1707 = vand.u32 2147483647, %v1697
    %vm1708 = vcmp.eq.f32.partialorder %v1707, 8.507059e+37
    %v1709 = vand.u32 %v1697, 2147483648
    %v1710 = vor.u32 1.1754944e-38, %v1709
    %v1711 = vsel %vm1708, %v1710, %v1706
    %v1712 = vmul.f32 1.0, %v1711
    %v1713 = vmul.f32 %v1642, %v1547
    %1715 = vrot.lane.b32.xlu0 %v1668, 64
    %v1716 = vpop.permute.xlu0 %1715
    %v1718 = vmul.f32 %v1598, %v1716
    %1720 = vrot.lane.b32.xlu0 %v1718, 32
    %v1721 = vpop.permute.xlu0 %1720
    %v1723 = vadd.f32 %v1713, %v1721
    %v1724 = vtanh.pop %v1723
    %1726 = vrot.lane.b32.xlu0 %v1724, 64
    %v1727 = vpop.permute.xlu0 %1726
    %v1729 = vmul.f32 %v1712, %v1727
    %v1730 = vld [vmem:[#allocation5] sm:$0xff]
    %v1731 = vld [vmem:[#allocation5 + $0x8] sm:$0xff]
    %v1732 = vld [vmem:[#allocation5 + $0x10] sm:$0xff]
    %v1733 = vld [vmem:[#allocation5 + $0x18] sm:$0xff]
    %s1734 = scalar_lea.vmem [#allocation5], 32
    %v1735 = vld [vmem:[%s1734] sm:$0xff]
    %v1736 = vld [vmem:[%s1734 + $0x8] sm:$0xff]
    %v1737 = vld [vmem:[%s1734 + $0x10] sm:$0xff]
    %v1738 = vld [vmem:[%s1734 + $0x18] sm:$0xff]
    %1740 = vrot.lane.b32.xlu0 %v1729, 32
    %v1741 = vpop.permute.xlu0 %1740
    %v1742 = vsel %vm323, %v1741, 0
    %1744 = vmatpush.msra.mxu0 0.0
    %1745 = vmatpush.msra.mxu0 0.0
    %1746 = vmatpush.msra.mxu0 0.0
    %1747 = vmatpush.msra.mxu0 0.0
    %1748 = vmatpush.msra.mxu0 0.0
    %1749 = vmatpush.msra.mxu0 0.0
    %1750 = vmatpush.msra.mxu0 0.0
    %1751 = vmatpush.msra.mxu0 0.0
    %1752 = vmatpush.msra.mxu0 0.0
    %1753 = vmatpush.msra.mxu0 0.0
    %1754 = vmatpush.msra.mxu0 0.0
    %1755 = vmatpush.msra.mxu0 0.0
    %1756 = vmatpush.msra.mxu0 %v1738
    %1757 = vmatpush.msra.mxu0 %v1737
    %1758 = vmatpush.msra.mxu0 %v1736
    %1759 = vmatpush.msra.mxu0 %v1735
    %1760 = vmatmul.f32.gmra.mxu0 %v1742
    %v1761 = vpop.f32.mrf.mxu0
    %v1762 = vadd.f32 0.0, %v1761
    %1763 = vdwg.mxu0
    %1764 = vmatpush.msra.mxu0 0.0
    %1765 = vmatpush.msra.mxu0 0.0
    %1766 = vmatpush.msra.mxu0 0.0
    %1767 = vmatpush.msra.mxu0 0.0
    %1768 = vmatpush.msra.mxu0 0.0
    %1769 = vmatpush.msra.mxu0 0.0
    %1770 = vmatpush.msra.mxu0 0.0
    %1771 = vmatpush.msra.mxu0 0.0
    %1772 = vmatpush.msra.mxu0 0.0
    %1773 = vmatpush.msra.mxu0 0.0
    %1774 = vmatpush.msra.mxu0 0.0
    %1775 = vmatpush.msra.mxu0 0.0
    %1776 = vmatpush.msra.mxu0 %v1733
    %1777 = vmatpush.msra.mxu0 %v1732
    %1778 = vmatpush.msra.mxu0 %v1731
    %1779 = vmatpush.msra.mxu0 %v1730
    %1780 = vmatmul.f32.gmra.mxu0 %v1557
    %v1781 = vpop.f32.mrf.mxu0
    %v1782 = vadd.f32 %v1762, %v1781
    %1783 = vdwg.mxu0
    %v1784 = vld [vmem:[%s5] sm:$0x1]
    %v1786 = vperm.slane %v1784, 0
    %v1788 = vadd.f32 %v1782, %v1786
    %v1789 = vld [vmem:[#allocation7] sm:$0xff]
    %v1790 = vld [vmem:[#allocation7 + $0x8] sm:$0xff]
    %v1791 = vld [vmem:[#allocation7 + $0x10] sm:$0xff]
    %v1792 = vld [vmem:[#allocation7 + $0x18] sm:$0xff]
    %v1793 = vld [vmem:[%s7] sm:$0x1]
    %v1795 = vperm.slane %v1793, 0
    %v1798 = vsel %vm323, %v1788, 0
    %1800 = vmatpush.msra.mxu0 0.0
    %1801 = vmatpush.msra.mxu0 0.0
    %1802 = vmatpush.msra.mxu0 0.0
    %1803 = vmatpush.msra.mxu0 0.0
    %1804 = vmatpush.msra.mxu0 0.0
    %1805 = vmatpush.msra.mxu0 0.0
    %1806 = vmatpush.msra.mxu0 0.0
    %1807 = vmatpush.msra.mxu0 0.0
    %1808 = vmatpush.msra.mxu0 0.0
    %1809 = vmatpush.msra.mxu0 0.0
    %1810 = vmatpush.msra.mxu0 0.0
    %1811 = vmatpush.msra.mxu0 0.0
    %1812 = vmatpush.msra.mxu0 %v1792
    %1813 = vmatpush.msra.mxu0 %v1791
    %1814 = vmatpush.msra.mxu0 %v1790
    %1815 = vmatpush.msra.mxu0 %v1789
    %1816 = vmatmul.f32.gmra.mxu0 %v1798
    %v1817 = vpop.f32.mrf.mxu0
    %v1818 = vadd.f32 %v1795, %v1817
    %1819 = vdwg.mxu0
    %v1820 = vmax.f32 %v1818, 0.0
    %v1821 = vld [vmem:[%s8] sm:$0xff]
    %v1822 = vld [vmem:[%s8 + $0x8] sm:$0xff]
    %v1823 = vld [vmem:[%s8 + $0x10] sm:$0xff]
    %v1824 = vld [vmem:[%s8 + $0x18] sm:$0xff]
    %v1825 = vld [vmem:[%s8 + $0x20] sm:$0xff]
    %v1826 = vld [vmem:[%s8 + $0x28] sm:$0xff]
    %v1827 = vld [vmem:[%s8 + $0x30] sm:$0xff]
    %v1828 = vld [vmem:[%s8 + $0x38] sm:$0xff]
    %v1829 = vld [vmem:[%s8 + $0x40] sm:$0xff]
    %v1830 = vld [vmem:[%s8 + $0x48] sm:$0xff]
    %v1831 = vld [vmem:[%s8 + $0x50] sm:$0xff]
    %v1832 = vld [vmem:[%s8 + $0x58] sm:$0xff]
    %v1833 = vld [vmem:[%s8 + $0x60] sm:$0xff]
    %v1834 = vld [vmem:[%s8 + $0x68] sm:$0xff]
    %v1835 = vld [vmem:[%s8 + $0x70] sm:$0xff]
    %v1836 = vld [vmem:[%s8 + $0x78] sm:$0xff]
    %v1837 = vld [vmem:[%s9] sm:$0x1]
    %v1839 = vperm.slane %v1837, 0
    %1841 = vmatpush.msra.mxu0 %v1836
    %1842 = vmatpush.msra.mxu0 %v1835
    %1843 = vmatpush.msra.mxu0 %v1834
    %1844 = vmatpush.msra.mxu0 %v1833
    %1845 = vmatpush.msra.mxu0 %v1832
    %1846 = vmatpush.msra.mxu0 %v1831
    %1847 = vmatpush.msra.mxu0 %v1830
    %1848 = vmatpush.msra.mxu0 %v1829
    %1849 = vmatpush.msra.mxu0 %v1828
    %1850 = vmatpush.msra.mxu0 %v1827
    %1851 = vmatpush.msra.mxu0 %v1826
    %1852 = vmatpush.msra.mxu0 %v1825
    %1853 = vmatpush.msra.mxu0 %v1824
    %1854 = vmatpush.msra.mxu0 %v1823
    %1855 = vmatpush.msra.mxu0 %v1822
    %1856 = vmatpush.msra.mxu0 %v1821
    %1857 = vmatmul.f32.gmra.mxu0 %v1820
    %v1858 = vpop.f32.mrf.mxu0
    %v1859 = vadd.f32 %v1839, %v1858
    %1860 = vdwg.mxu0
    %vm1861 = vcmask 58368
    %1862 = vst.msk [vmem:[#allocation8] sm:$0x3] %vm1861, %v1859
    // Predicated region
    $region54: #{tpu_custom_call.1} parent=1 // pred_check
      _
    $region55: #{tpu_custom_call.1} parent=1 // pred_check_branch
      %1864 = sbr.rel (0) target = $region57
    $region56: #{tpu_custom_call.1} parent=1 // pred_region
      %1866 = vsyncadd [#allocation4], 0
      %s1868 = sshll.u32 [#allocation8], 4
      %s1869 = int_to_ptr.vmem [resolvable:$true] %s1868
      %s1870 = sshll.u32 %s10, 4
      %s1871 = int_to_ptr.hbm [resolvable:$true] %s1870
      %1873 = dma.vmem_to_hbm [thread:$0]  %s1869, 32, %s1871, [#allocation4]
    $region57: #{tpu_custom_call.1} parent=1 // pred_fallthru
      _
    // Predicated region
    $region58: #{tpu_custom_call.1} parent=1 // pred_check
      _
    $region59: #{tpu_custom_call.1} parent=1 // pred_check_branch
      %1875 = sbr.rel (0) target = $region61
    $region60: #{tpu_custom_call.1} parent=1 // pred_region
      %1877 = dma.done [#allocation4], 32
    $region61: #{tpu_custom_call.1} parent=1 // pred_fallthru
      _
    %1878 = vsyncpa [#allocation3], 1
    %1879 = vsyncpa [#allocation6], 1
    %1880 = vsyncpa [#allocation4], 1

</llo_original>
